<compile_context>
chip_gen: v6e
topology: v6e:2x2x1
jax: 0.10.0
libtpu: 0.0.40
codegen_flags: <defaults>
</compile_context>

<pallas_src>
from functools import partial

import jax
import jax.numpy as jnp
from jax import lax
from jax.experimental import pallas as pl
from jax.experimental.pallas import tpu as pltpu

DT = 0.01
THETA = 1.0


def _round_up(n, m):
    return ((n + m - 1) // m) * m


def _largest_divisor_leq(n, cap):
    cap = max(1, min(n, cap))
    for d in range(cap, 0, -1):
        if n % d == 0:
            return d
    return 1


def quantize(x, f):
    # Fixed-point quantization. For f >= 24 it is a numerical no-op on f32.
    if f >= 24:
        return x
    scale = jnp.float32(2.0 ** f)
    inv = jnp.float32(2.0 ** (-f))
    return jnp.round(x * scale) * inv


# ----------------------------------------------------------------------------
# Shared preprocessing (used by both the Pallas wrapper and the JAX reference)
# ----------------------------------------------------------------------------
def _prepare(x, w_hidden, w_out, omega, b_offset, tau_mem, *,
             bit_precision, dt, mxu_dtype):
    T, B, I = x.shape
    H = w_hidden.shape[0]
    O = w_out.shape[0]
    Bp = _round_up(B, 8)
    Hp = _round_up(H, 128)
    Op = _round_up(O, 128)
    Ip = _round_up(I, 16)

    # quantize_tensor(x, bit_precision); pad batch / input feature dims.
    x_q = quantize(x, bit_precision)
    x_q = jnp.pad(x_q, ((0, 0), (0, Bp - B), (0, Ip - I)))

    # Split the RFCell weight into input / recurrent parts, transpose to
    # (feature_in, feature_out), fold dt in.
    wx_dt = jnp.transpose(w_hidden[:, :I]) * dt              # (I, H)
    wz_dt = jnp.transpose(w_hidden[:, I:]) * dt              # (H, H)
    wo_t = quantize(jnp.transpose(w_out), bit_precision)     # (H, O) BP-quantized

    omega = jnp.reshape(omega, (1, H)).astype(jnp.float32)
    b_offset = jnp.reshape(b_offset, (1, H)).astype(jnp.float32)
    tau_mem = jnp.reshape(tau_mem, (1, O)).astype(jnp.float32)
    alpha = jnp.exp(-dt / tau_mem)                           # (1, O)
    one_m_alpha = 1.0 - alpha

    c_decay = 1.0 + dt * (-b_offset)                         # (1, H)
    c_omega = dt * omega                                     # (1, H)

    def pad2(a, r, c, cv=0.0):
        return jnp.pad(a, ((0, r - a.shape[0]), (0, c - a.shape[1])),
                       constant_values=cv)

    # Fused recurrent + output weight: [:Hp] columns = recurrent drive (dt
    # folded), [Hp:] columns = LI drive with (1 - alpha) folded in. Single MXU
    # RHS reused every step.  Binary spikes are exact in bf16.
    wz_p = pad2(wz_dt, Hp, Hp)
    wo_p = pad2(wo_t * one_m_alpha, Hp, Op)
    wcat = jnp.concatenate([wz_p, wo_p], axis=1).astype(mxu_dtype)   # (Hp, Hp+Op)
    wx_p = pad2(wx_dt, Ip, Hp).astype(mxu_dtype)                     # (Ip, Hp)

    # Packed coefficient rows: row0 = 1 - dt*b_offset, row1 = dt*omega.
    cdc = jnp.concatenate([pad2(c_decay, 1, Hp, cv=1.0),
                           pad2(c_omega, 1, Hp)], axis=0)            # (2, Hp)
    alpha_p = pad2(alpha, 1, Op)                                     # (1, Op)

    return dict(x=x_q, wx=wx_p, wcat=wcat, cdc=cdc, alpha=alpha_p,
                dims=(T, B, I, H, O, Bp, Hp, Op, Ip))


# ----------------------------------------------------------------------------
# Pallas kernel: one grid step == TS timesteps (whole batch).
# Carries: z / u / out_u in resident output blocks; v / rec / spike-acc in VMEM
# scratch.  grid = (time_blocks,) with "arbitrary" semantics (carried axis).
# ----------------------------------------------------------------------------
def rfrsnn_kernel(
    # inputs
    x_ref,         # (1, TS*Bp, Ip) f32   quantized input, one time block
    wx_ref,        # (Ip, Hp)  mxu dtype  dt * Wx
    wcat_hbm,      # (Hp, Hp+Op) mxu dtype, HBM ref (single-buffered manually)
    cdc_ref,       # (2, Hp)   f32   row0 = 1 - dt*b_offset, row1 = dt*omega
    alpha_ref,     # (1, Op)   f32
    # outputs ([out_seq], z, u, out_u, num_spikes) + scratch — unpacked below
    *rest,
    ts, t_total, bb, hp, theta, bit_precision, mxu_dtype, store_seq, has_tail,
):
    if store_seq:
        (out_seq_ref, z_ref, u_ref, outu_ref, nsp_ref,
         w_sc, w_sem, ix_sc, v_sc, rec_sc, spk_sc) = rest
    else:
        (z_ref, u_ref, outu_ref, nsp_ref,
         w_sc, w_sem, ix_sc, v_sc, rec_sc, spk_sc) = rest
        out_seq_ref = None

    t_blk = pl.program_id(0)

    @pl.when(t_blk == 0)
    def _init():
        # Fused weights HBM -> VMEM exactly once (no double buffer).
        cp = pltpu.make_async_copy(wcat_hbm, w_sc, w_sem)
        cp.start()
        cp.wait()
        z_ref[...] = jnp.zeros_like(z_ref)
        u_ref[...] = jnp.zeros_like(u_ref)
        outu_ref[...] = jnp.zeros_like(outu_ref)
        v_sc[...] = jnp.zeros_like(v_sc)
        rec_sc[...] = jnp.zeros_like(rec_sc)
        spk_sc[...] = jnp.zeros_like(spk_sc)
        nsp_ref[...] = jnp.zeros_like(nsp_ref)

    # Input projection for the whole time block: one MXU-efficient
    # (TS*Bp, Ip) x (Ip, Hp) matmul, off the sequential critical path; i_x never
    # touches HBM.
    ix_sc[...] = jnp.dot(x_ref[0].astype(mxu_dtype), wx_ref[...],
                         preferred_element_type=jnp.float32)

    # Weights / coefficients read once per grid step.
    wcat = w_sc[...]
    c_decay = cdc_ref[0:1, :]
    c_omega = cdc_ref[1:2, :]
    alpha = alpha_ref[...]

    q_scale = jnp.float32(2.0 ** bit_precision)
    q_inv = jnp.float32(2.0 ** (-bit_precision))

    def step(s, carry):
        z, u, v, out_u, rec, spk = carry          # z in mxu_dtype, rest f32
        row = pl.multiple_of(s * bb, 8)
        ix_s = ix_sc[pl.ds(row, bb), :]
        # RF update. `rec` is z_{s-1} @ wz, carried from the previous step.
        u_new = c_decay * u - c_omega * v + (ix_s + rec)
        v_new = c_decay * v + c_omega * u
        fire = u_new - theta > 0.0
        z_new = fire.astype(mxu_dtype)            # binary -> exact in bf16
        spk_new = spk + fire.astype(jnp.float32)
        # Single fused MXU matmul: [:hp] -> recurrent drive for the next step,
        # [hp:] -> LI drive for this step ((1 - alpha) already folded in).
        zc = jnp.dot(z_new, wcat, preferred_element_type=jnp.float32)
        rec_new = zc[:, :hp]
        out_new = alpha * out_u + zc[:, hp:]
        if bit_precision < 24:
            out_new = jnp.round(out_new * q_scale) * q_inv
        if has_tail:
            # Freeze all state on padded tail steps (sequence padded to TS).
            live = (t_blk * ts + s) < t_total
            z_new = jnp.where(live, z_new, z)
            u_new = jnp.where(live, u_new, u)
            v_new = jnp.where(live, v_new, v)
            out_new = jnp.where(live, out_new, out_u)
            rec_new = jnp.where(live, rec_new, rec)
            spk_new = jnp.where(live, spk_new, spk)
        if store_seq:
            out_seq_ref[s] = out_new
        return z_new, u_new, v_new, out_new, rec_new, spk_new

    carry0 = (z_ref[...].astype(mxu_dtype), u_ref[...], v_sc[...],
              outu_ref[...], rec_sc[...], spk_sc[...])
    z, u, v, out_u, rec, spk = lax.fori_loop(0, ts, step, carry0,
                                             unroll=min(8, ts))

    z_ref[...] = z.astype(jnp.float32)
    u_ref[...] = u
    outu_ref[...] = out_u
    v_sc[...] = v
    rec_sc[...] = rec
    spk_sc[...] = spk

    @pl.when(t_blk == pl.num_programs(0) - 1)
    def _finalize():
        nsp_ref[...] = jnp.sum(spk).reshape(1, 1)


# ----------------------------------------------------------------------------
# Wrapper
# ----------------------------------------------------------------------------
def _pick_vmem_limit(requested):
    if requested is not None:
        return int(requested)
    try:
        cap = int(pltpu.get_tpu_info().vmem_capacity_bytes)
        # ~100 MiB on v5e/v6e (128 MiB physical), ~48 MiB on v7x (64 MiB).
        return min(100 * 1024 * 1024, (cap * 3) // 4)
    except Exception:
        return None


def rfrsnn_bp_forward(x, w_hidden, w_out, omega, b_offset, tau_mem, *,
                      bit_precision=32, sub_seq_length=0, label_last=False,
                      dt=DT, ts_max=32, mxu_dtype=jnp.bfloat16,
                      vmem_limit_bytes=None):
    prep = _prepare(x, w_hidden, w_out, omega, b_offset, tau_mem,
                    bit_precision=bit_precision, dt=dt, mxu_dtype=mxu_dtype)
    T, B, I, H, O, Bp, Hp, Op, Ip = prep["dims"]
    store_seq = not label_last

    # ---- VMEM budget -> time-block size TS ---------------------------------
    vmem_limit = _pick_vmem_limit(vmem_limit_bytes)
    budget = int(0.8 * (vmem_limit if vmem_limit is not None
                        else 32 * 1024 * 1024))
    wb = jnp.dtype(mxu_dtype).itemsize
    fixed = (Hp * (Hp + Op) * wb              # single-buffered fused weights
             + 2 * Ip * Hp * wb               # wx (double-buffered, small)
             + 2 * 4 * (2 * Hp + Op)          # coefficient rows
             + 2 * 4 * Bp * (2 * Hp + Op)     # resident z/u/out_u outputs
             + 3 * 4 * Bp * Hp)               # v / rec / spike scratch
    per_ts = 4 * Bp * Hp + 2 * 4 * Bp * Ip    # ix scratch + double-buffered x
    if store_seq:
        per_ts += 2 * 4 * Bp * Op             # double-buffered out_seq block
    ts_cap = max(1, (budget - fixed) // max(per_ts, 1))
    ts_target = max(1, min(ts_max, ts_cap))

    ts_div = _largest_divisor_leq(T, ts_target)
    if ts_div >= min(ts_target, 8):
        TS, T_pad = ts_div, T
    else:
        # Poor divisor (prime / odd T): pad the sequence and mask the tail.
        n_blk = -(-T // ts_target)
        TS = -(-T // n_blk)
        T_pad = TS * n_blk
    has_tail = T_pad != T
    n_tblk = T_pad // TS

    # Pad + reshape x so each grid step gets a 2-D (TS*Bp, Ip) LHS directly
    # (contiguous metadata-only reshape; no extra HBM pass).
    x_q = prep["x"]                                      # (T, Bp, Ip)
    if has_tail:
        x_q = jnp.pad(x_q, ((0, T_pad - T), (0, 0), (0, 0)))
    x_blk = x_q.reshape(n_tblk, TS * Bp, Ip)

    kernel = partial(rfrsnn_kernel, ts=TS, t_total=T, bb=Bp, hp=Hp,
                     theta=THETA, bit_precision=bit_precision,
                     mxu_dtype=mxu_dtype, store_seq=store_seq,
                     has_tail=has_tail)

    in_specs = [
        pl.BlockSpec((1, TS * Bp, Ip), lambda t: (t, 0, 0)),
        pl.BlockSpec((Ip, Hp), lambda t: (0, 0)),
        pl.BlockSpec(memory_space=pl.ANY),               # fused weights (HBM)
        pl.BlockSpec((2, Hp), lambda t: (0, 0)),
        pl.BlockSpec((1, Op), lambda t: (0, 0)),
    ]
    out_specs = []
    out_shapes = []
    if store_seq:
        out_specs.append(pl.BlockSpec((TS, Bp, Op), lambda t: (t, 0, 0)))
        out_shapes.append(jax.ShapeDtypeStruct((T_pad, Bp, Op), jnp.float32))
    out_specs += [
        pl.BlockSpec((Bp, Hp), lambda t: (0, 0)),        # z carry / final
        pl.BlockSpec((Bp, Hp), lambda t: (0, 0)),        # u carry / final
        pl.BlockSpec((Bp, Op), lambda t: (0, 0)),        # out_u carry / final
        pl.BlockSpec((1, 1), lambda t: (0, 0)),          # spike count
    ]
    out_shapes += [
        jax.ShapeDtypeStruct((Bp, Hp), jnp.float32),
        jax.ShapeDtypeStruct((Bp, Hp), jnp.float32),
        jax.ShapeDtypeStruct((Bp, Op), jnp.float32),
        jax.ShapeDtypeStruct((1, 1), jnp.float32),
    ]

    grid_spec = pltpu.PrefetchScalarGridSpec(
        num_scalar_prefetch=0,
        grid=(n_tblk,),                                  # carried time axis
        in_specs=in_specs,
        out_specs=out_specs,
        scratch_shapes=[
            pltpu.VMEM((Hp, Hp + Op), mxu_dtype),        # single-buffered weights
            pltpu.SemaphoreType.DMA(()),                 # weight-copy semaphore
            pltpu.VMEM((TS * Bp, Hp), jnp.float32),      # per-block input drive
            pltpu.VMEM((Bp, Hp), jnp.float32),           # v carry
            pltpu.VMEM((Bp, Hp), jnp.float32),           # recurrent-drive carry
            pltpu.VMEM((Bp, Hp), jnp.float32),           # spike accumulator
        ],
    )

    cp_kwargs = dict(dimension_semantics=("arbitrary",))
    if vmem_limit is not None:
        cp_kwargs["vmem_limit_bytes"] = int(vmem_limit)

    results = pl.pallas_call(
        kernel,
        out_shape=tuple(out_shapes),
        grid_spec=grid_spec,
        compiler_params=pltpu.CompilerParams(**cp_kwargs),
    )(x_blk, prep["wx"], prep["wcat"], prep["cdc"], prep["alpha"])

    if store_seq:
        outputs_p, hz_p, hu_p, ou_p, nsp_p = results
        outputs = outputs_p[:T, :B, :O]
        if sub_seq_length > 0:
            outputs = outputs[sub_seq_length:]
        # TODO(synk): gate the per-step out_seq stores for the first
        #             sub_seq_length steps instead of writing then slicing.
    else:
        hz_p, hu_p, ou_p, nsp_p = results
        outputs = ou_p[None, :B, :O]                     # label_last: final only

    hidden_z = hz_p[:B, :H]
    hidden_u = hu_p[:B, :H]
    out_u = ou_p[:B, :O]
    num_spikes = jnp.sum(nsp_p)
    return outputs, ((hidden_z, hidden_u), out_u), num_spikes


# ----------------------------------------------------------------------------
# Pure-JAX reference (same assumed semantics & preprocessing) for correctness.
# ----------------------------------------------------------------------------
def rfrsnn_bp_reference(x, w_hidden, w_out, omega, b_offset, tau_mem, *,
                        bit_precision=32, sub_seq_length=0, label_last=False,
                        dt=DT, mxu_dtype=jnp.bfloat16):
    prep = _prepare(x, w_hidden, w_out, omega, b_offset, tau_mem,
                    bit_precision=bit_precision, dt=dt, mxu_dtype=mxu_dtype)
    T, B, I, H, O, Bp, Hp, Op, Ip = prep["dims"]
    wcat = prep["wcat"]
    c_decay = prep["cdc"][0:1, :]
    c_omega = prep["cdc"][1:2, :]
    alpha = prep["alpha"]
    q_scale = jnp.float32(2.0 ** bit_precision)
    q_inv = jnp.float32(2.0 ** (-bit_precision))

    # Same bf16 input projection the kernel performs per time block.
    ix = jnp.einsum("tbi,ih->tbh", prep["x"].astype(mxu_dtype), prep["wx"],
                    preferred_element_type=jnp.float32)

    def step(carry, ix_t):
        z, u, v, out_u, rec, spk = carry
        u_new = c_decay * u - c_omega * v + (ix_t + rec)
        v_new = c_decay * v + c_omega * u
        fire = u_new - THETA > 0.0
        z_new = fire.astype(mxu_dtype)
        spk = spk + fire.astype(jnp.float32)
        zc = jnp.dot(z_new, wcat, preferred_element_type=jnp.float32)
        rec_new = zc[:, :Hp]
        out_u = alpha * out_u + zc[:, Hp:]
        if bit_precision < 24:
            out_u = jnp.round(out_u * q_scale) * q_inv
        return (z_new, u_new, v_new, out_u, rec_new, spk), out_u

    init = (jnp.zeros((Bp, Hp), mxu_dtype),
            jnp.zeros((Bp, Hp), jnp.float32),
            jnp.zeros((Bp, Hp), jnp.float32),
            jnp.zeros((Bp, Op), jnp.float32),
            jnp.zeros((Bp, Hp), jnp.float32),
            jnp.zeros((Bp, Hp), jnp.float32))
    (z, u, v, out_u, rec, spk), outs = lax.scan(step, init, ix)

    outputs = outs[:, :B, :O]
    if sub_seq_length > 0:
        outputs = outputs[sub_seq_length:]
    if label_last:
        outputs = outputs[-1:]
    return (outputs, ((z[:B, :H].astype(jnp.float32), u[:B, :H]),
                      out_u[:B, :O]), jnp.sum(spk))


# ----------------------------------------------------------------------------
# Demo / correctness check
# ----------------------------------------------------------------------------
def _run_case(name, *, T, B, I, H, O, bit_precision, x_scale, seed,
              ts_max=32, label_last=False):
    key = jax.random.PRNGKey(seed)
    k_x, k_wh, k_wo, k_om, k_bo, k_tau = jax.random.split(key, 6)

    # x scaled up so the RF units actually cross threshold and spike.
    x = x_scale * jax.random.normal(k_x, (T, B, I), dtype=jnp.float32)
    kh = 1.0 / jnp.sqrt(jnp.float32(I + H))
    w_hidden = jax.random.uniform(k_wh, (H, I + H), jnp.float32, -kh, kh)
    omega = jax.random.uniform(k_om, (1, H), jnp.float32, 5.0, 10.0)
    b_offset = jax.random.uniform(k_bo, (1, H), jnp.float32, 0.0, 1.0)
    ko = 1.0 / jnp.sqrt(jnp.float32(H))
    w_out = jax.random.uniform(k_wo, (O, H), jnp.float32, -ko, ko)
    tau_mem = 20.0 + 5.0 * jax.random.normal(k_tau, (1, O), dtype=jnp.float32)

    outputs, ((hz, hu), ou), nsp = rfrsnn_bp_forward(
        x, w_hidden, w_out, omega, b_offset, tau_mem,
        bit_precision=bit_precision, dt=DT, ts_max=ts_max,
        label_last=label_last, mxu_dtype=jnp.bfloat16)
    jax.block_until_ready((outputs, hz, hu, ou, nsp))

    r_outputs, ((r_hz, r_hu), r_ou), r_nsp = rfrsnn_bp_reference(
        x, w_hidden, w_out, omega, b_offset, tau_mem,
        bit_precision=bit_precision, dt=DT, label_last=label_last,
        mxu_dtype=jnp.bfloat16)

    q = max(2.0 ** (-bit_precision), 1e-6)
    exp_T = 1 if label_last else T
    assert outputs.shape == (exp_T, B, O), (name, outputs.shape)
    assert jnp.allclose(outputs, r_outputs, atol=2 * q), name
    assert jnp.allclose(hz, r_hz, atol=1e-5), name
    assert jnp.allclose(hu, r_hu, atol=1e-4), name
    assert jnp.allclose(ou, r_ou, atol=2 * q), name
    assert abs(float(nsp) - float(r_nsp)) <= 0.5, name


if __name__ == "__main__":
    # Small shapes consistent with the module: x is (seq, batch, input_size).
    _run_case("small", T=8, B=2, I=16, H=32, O=8,
              bit_precision=12, x_scale=100.0, seed=0)
    # Exercises padding of B/H/O to TPU-aligned shapes.
    _run_case("padded", T=12, B=16, I=16, H=40, O=10,
              bit_precision=12, x_scale=100.0, seed=0)
    # Prime T with a small ts_max forces T-padding + in-kernel tail masking.
    _run_case("tail_mask", T=13, B=4, I=12, H=48, O=6,
              bit_precision=12, x_scale=100.0, seed=1, ts_max=8)
    # label_last skips the per-step out_seq HBM writeback entirely.
    _run_case("label_last", T=9, B=8, I=16, H=32, O=8,
              bit_precision=12, x_scale=100.0, seed=2, label_last=True)
    print("KERNEL_OK")
</pallas_src>

<mosaic_0001>
module attributes {stable_mosaic.version = 11 : i64} {
  func.func @rfrsnn_kernel(%arg0: i32, %arg1: memref<1x64x16xf32, #tpu.memory_space<vmem>>, %arg2: memref<16x128xbf16, #tpu.memory_space<vmem>>, %arg3: memref<128x256xbf16, #tpu.memory_space<any>>, %arg4: memref<2x128xf32, #tpu.memory_space<vmem>>, %arg5: memref<1x128xf32, #tpu.memory_space<vmem>>, %arg6: memref<8x8x128xf32, #tpu.memory_space<vmem>>, %arg7: memref<8x128xf32, #tpu.memory_space<vmem>>, %arg8: memref<8x128xf32, #tpu.memory_space<vmem>>, %arg9: memref<8x128xf32, #tpu.memory_space<vmem>>, %arg10: memref<1x1xf32, #tpu.memory_space<vmem>>, %arg11: memref<128x256xbf16, #tpu.memory_space<vmem>>, %arg12: memref<!tpu.dma_semaphore, #tpu.memory_space<semaphore_mem>>, %arg13: memref<64x128xf32, #tpu.memory_space<vmem>>, %arg14: memref<8x128xf32, #tpu.memory_space<vmem>>, %arg15: memref<8x128xf32, #tpu.memory_space<vmem>>, %arg16: memref<8x128xf32, #tpu.memory_space<vmem>>) attributes {dimension_semantics = [#tpu.dimension_semantics<arbitrary>], iteration_bounds = array<i64: 1>, scalar_prefetch = 0 : i64, scratch_operands = 6 : i64, tpu.core_type = #tpu.core_type<tc>, window_params = [{transform_indices = @transform_0, window_bounds = array<i64: 1, 64, 16>}, {pipeline_mode = #tpu.pipeline_mode<synchronous>, transform_indices = @transform_1, window_bounds = array<i64: 16, 128>}, {}, {pipeline_mode = #tpu.pipeline_mode<synchronous>, transform_indices = @transform_3, window_bounds = array<i64: 2, 128>}, {pipeline_mode = #tpu.pipeline_mode<synchronous>, transform_indices = @transform_4, window_bounds = array<i64: 1, 128>}, {transform_indices = @transform_5, window_bounds = array<i64: 8, 8, 128>}, {pipeline_mode = #tpu.pipeline_mode<synchronous>, transform_indices = @transform_6, window_bounds = array<i64: 8, 128>}, {pipeline_mode = #tpu.pipeline_mode<synchronous>, transform_indices = @transform_7, window_bounds = array<i64: 8, 128>}, {pipeline_mode = #tpu.pipeline_mode<synchronous>, transform_indices = @transform_8, window_bounds = array<i64: 8, 128>}, {pipeline_mode = #tpu.pipeline_mode<synchronous>, transform_indices = @transform_9, window_bounds = array<i64: 1, 1>}]} {
    %c0_i32 = arith.constant 0 : i32
    %0 = arith.cmpi eq, %arg0, %c0_i32 : i32
    %1 = arith.extui %0 : i1 to i32
    %c0_i32_0 = arith.constant 0 : i32
    %2 = arith.cmpi ne, %1, %c0_i32_0 : i32
    scf.if %2 {
      tpu.enqueue_dma source(%arg3 : memref<128x256xbf16, #tpu.memory_space<any>>) target(%arg11 : memref<128x256xbf16, #tpu.memory_space<vmem>>) target_semaphore(%arg12 : memref<!tpu.dma_semaphore, #tpu.memory_space<semaphore_mem>>)
      tpu.wait_dma2 semaphore(%arg12 : memref<!tpu.dma_semaphore, #tpu.memory_space<semaphore_mem>>) src(%arg3 : memref<128x256xbf16, #tpu.memory_space<any>>) dst(%arg11 : memref<128x256xbf16, #tpu.memory_space<vmem>>)
      %cst_99 = arith.constant 0.000000e+00 : f32
      %358 = vector.broadcast %cst_99 : f32 to vector<8x128xf32>
      %c0_100 = arith.constant 0 : index
      %c0_101 = arith.constant 0 : index
      %359 = vector.load %arg7[%c0_100, %c0_101] : memref<8x128xf32, #tpu.memory_space<vmem>>, vector<8x128xf32>
      tpu.vector_store %arg7[%c0_100, %c0_101], %358 {strides = array<i32>} : memref<8x128xf32, #tpu.memory_space<vmem>>, vector<8x128xf32>,
      %cst_102 = arith.constant 0.000000e+00 : f32
      %360 = vector.broadcast %cst_102 : f32 to vector<8x128xf32>
      %c0_103 = arith.constant 0 : index
      %c0_104 = arith.constant 0 : index
      %361 = vector.load %arg8[%c0_103, %c0_104] : memref<8x128xf32, #tpu.memory_space<vmem>>, vector<8x128xf32>
      tpu.vector_store %arg8[%c0_103, %c0_104], %360 {strides = array<i32>} : memref<8x128xf32, #tpu.memory_space<vmem>>, vector<8x128xf32>,
      %cst_105 = arith.constant 0.000000e+00 : f32
      %362 = vector.broadcast %cst_105 : f32 to vector<8x128xf32>
      %c0_106 = arith.constant 0 : index
      %c0_107 = arith.constant 0 : index
      %363 = vector.load %arg9[%c0_106, %c0_107] : memref<8x128xf32, #tpu.memory_space<vmem>>, vector<8x128xf32>
      tpu.vector_store %arg9[%c0_106, %c0_107], %362 {strides = array<i32>} : memref<8x128xf32, #tpu.memory_space<vmem>>, vector<8x128xf32>,
      %cst_108 = arith.constant 0.000000e+00 : f32
      %364 = vector.broadcast %cst_108 : f32 to vector<8x128xf32>
      %c0_109 = arith.constant 0 : index
      %c0_110 = arith.constant 0 : index
      %365 = vector.load %arg14[%c0_109, %c0_110] : memref<8x128xf32, #tpu.memory_space<vmem>>, vector<8x128xf32>
      tpu.vector_store %arg14[%c0_109, %c0_110], %364 {strides = array<i32>} : memref<8x128xf32, #tpu.memory_space<vmem>>, vector<8x128xf32>,
      %cst_111 = arith.constant 0.000000e+00 : f32
      %366 = vector.broadcast %cst_111 : f32 to vector<8x128xf32>
      %c0_112 = arith.constant 0 : index
      %c0_113 = arith.constant 0 : index
      %367 = vector.load %arg15[%c0_112, %c0_113] : memref<8x128xf32, #tpu.memory_space<vmem>>, vector<8x128xf32>
      tpu.vector_store %arg15[%c0_112, %c0_113], %366 {strides = array<i32>} : memref<8x128xf32, #tpu.memory_space<vmem>>, vector<8x128xf32>,
      %cst_114 = arith.constant 0.000000e+00 : f32
      %368 = vector.broadcast %cst_114 : f32 to vector<8x128xf32>
      %c0_115 = arith.constant 0 : index
      %c0_116 = arith.constant 0 : index
      %369 = vector.load %arg16[%c0_115, %c0_116] : memref<8x128xf32, #tpu.memory_space<vmem>>, vector<8x128xf32>
      tpu.vector_store %arg16[%c0_115, %c0_116], %368 {strides = array<i32>} : memref<8x128xf32, #tpu.memory_space<vmem>>, vector<8x128xf32>,
      %cst_117 = arith.constant 0.000000e+00 : f32
      %370 = vector.broadcast %cst_117 : f32 to vector<1x1xf32>
      %c0_118 = arith.constant 0 : index
      %c0_119 = arith.constant 0 : index
      %371 = vector.load %arg10[%c0_118, %c0_119] : memref<1x1xf32, #tpu.memory_space<vmem>>, vector<1x1xf32>
      tpu.vector_store %arg10[%c0_118, %c0_119], %370 {strides = array<i32>} : memref<1x1xf32, #tpu.memory_space<vmem>>, vector<1x1xf32>,
    } else {
    }
    %c0 = arith.constant 0 : index
    %c0_1 = arith.constant 0 : index
    %c0_2 = arith.constant 0 : index
    %3 = vector.load %arg1[%c0, %c0_1, %c0_2] : memref<1x64x16xf32, #tpu.memory_space<vmem>>, vector<1x64x16xf32>
    %4 = vector.shape_cast %3 : vector<1x64x16xf32> to vector<64x16xf32>
    %5 = arith.truncf %4 : vector<64x16xf32> to vector<64x16xbf16>
    %c0_3 = arith.constant 0 : index
    %c0_4 = arith.constant 0 : index
    %6 = vector.load %arg2[%c0_3, %c0_4] : memref<16x128xbf16, #tpu.memory_space<vmem>>, vector<16x128xbf16>
    %cst = arith.constant dense<0.000000e+00> : vector<64x128xf32>
    %7 = tpu.matmul %5, %6, %cst {dimension_numbers = #tpu.dot_dimension_numbers<[1], [0], [0], [1], [0, 0, 1, 1], [], []>} : vector<64x16xbf16>, vector<16x128xbf16>, vector<64x128xf32> -> vector<64x128xf32>
    %c0_5 = arith.constant 0 : index
    %c0_6 = arith.constant 0 : index
    %8 = vector.load %arg13[%c0_5, %c0_6] : memref<64x128xf32, #tpu.memory_space<vmem>>, vector<64x128xf32>
    tpu.vector_store %arg13[%c0_5, %c0_6], %7 {strides = array<i32>} : memref<64x128xf32, #tpu.memory_space<vmem>>, vector<64x128xf32>,
    %c0_7 = arith.constant 0 : index
    %c0_8 = arith.constant 0 : index
    %9 = vector.load %arg11[%c0_7, %c0_8] : memref<128x256xbf16, #tpu.memory_space<vmem>>, vector<128x256xbf16>
    %c0_9 = arith.constant 0 : index
    %c0_10 = arith.constant 0 : index
    %10 = vector.load %arg4[%c0_9, %c0_10] : memref<2x128xf32, #tpu.memory_space<vmem>>, vector<1x128xf32>
    %c1 = arith.constant 1 : index
    %c0_11 = arith.constant 0 : index
    %11 = vector.load %arg4[%c1, %c0_11] : memref<2x128xf32, #tpu.memory_space<vmem>>, vector<1x128xf32>
    %c0_12 = arith.constant 0 : index
    %c0_13 = arith.constant 0 : index
    %12 = vector.load %arg5[%c0_12, %c0_13] : memref<1x128xf32, #tpu.memory_space<vmem>>, vector<1x128xf32>
    %c0_14 = arith.constant 0 : index
    %c0_15 = arith.constant 0 : index
    %13 = vector.load %arg7[%c0_14, %c0_15] : memref<8x128xf32, #tpu.memory_space<vmem>>, vector<8x128xf32>
    %14 = arith.truncf %13 : vector<8x128xf32> to vector<8x128xbf16>
    %c0_16 = arith.constant 0 : index
    %c0_17 = arith.constant 0 : index
    %15 = vector.load %arg8[%c0_16, %c0_17] : memref<8x128xf32, #tpu.memory_space<vmem>>, vector<8x128xf32>
    %c0_18 = arith.constant 0 : index
    %c0_19 = arith.constant 0 : index
    %16 = vector.load %arg14[%c0_18, %c0_19] : memref<8x128xf32, #tpu.memory_space<vmem>>, vector<8x128xf32>
    %c0_20 = arith.constant 0 : index
    %c0_21 = arith.constant 0 : index
    %17 = vector.load %arg9[%c0_20, %c0_21] : memref<8x128xf32, #tpu.memory_space<vmem>>, vector<8x128xf32>
    %c0_22 = arith.constant 0 : index
    %c0_23 = arith.constant 0 : index
    %18 = vector.load %arg15[%c0_22, %c0_23] : memref<8x128xf32, #tpu.memory_space<vmem>>, vector<8x128xf32>
    %c0_24 = arith.constant 0 : index
    %c0_25 = arith.constant 0 : index
    %19 = vector.load %arg16[%c0_24, %c0_25] : memref<8x128xf32, #tpu.memory_space<vmem>>, vector<8x128xf32>
    %cst_26 = arith.constant 4.096000e+03 : f32
    %cst_27 = arith.constant 2.44140625E-4 : f32
    %c0_i32_28 = arith.constant 0 : i32
    %c8_i32 = arith.constant 8 : i32
    %20 = arith.muli %c0_i32_28, %c8_i32 : i32
    %21 = tpu.assume_multiple %20, 8 : i32
    %22 = arith.index_cast %21 : i32 to index
    %c0_29 = arith.constant 0 : index
    %23 = vector.load %arg13[%22, %c0_29] : memref<64x128xf32, #tpu.memory_space<vmem>>, vector<8x128xf32>
    %24 = vector.broadcast %10 : vector<1x128xf32> to vector<8x128xf32>
    %25 = arith.mulf %24, %15 : vector<8x128xf32>
    %26 = vector.broadcast %11 : vector<1x128xf32> to vector<8x128xf32>
    %27 = arith.mulf %26, %16 : vector<8x128xf32>
    %28 = arith.subf %25, %27 : vector<8x128xf32>
    %29 = arith.addf %23, %18 : vector<8x128xf32>
    %30 = arith.addf %28, %29 : vector<8x128xf32>
    %31 = vector.broadcast %10 : vector<1x128xf32> to vector<8x128xf32>
    %32 = arith.mulf %31, %16 : vector<8x128xf32>
    %33 = vector.broadcast %11 : vector<1x128xf32> to vector<8x128xf32>
    %34 = arith.mulf %33, %15 : vector<8x128xf32>
    %35 = arith.addf %32, %34 : vector<8x128xf32>
    %cst_30 = arith.constant 1.000000e+00 : f32
    %36 = vector.broadcast %cst_30 : f32 to vector<8x128xf32>
    %37 = arith.subf %30, %36 : vector<8x128xf32>
    %cst_31 = arith.constant 0.000000e+00 : f32
    %38 = vector.broadcast %cst_31 : f32 to vector<8x128xf32>
    %39 = arith.cmpf ogt, %37, %38 : vector<8x128xf32>
    %40 = arith.extui %39 : vector<8x128xi1> to vector<8x128xi32>
    %41 = arith.sitofp %40 : vector<8x128xi32> to vector<8x128xf32>
    %42 = arith.truncf %41 : vector<8x128xf32> to vector<8x128xbf16>
    %43 = arith.extui %39 : vector<8x128xi1> to vector<8x128xi32>
    %44 = arith.sitofp %43 : vector<8x128xi32> to vector<8x128xf32>
    %45 = arith.addf %19, %44 : vector<8x128xf32>
    %cst_32 = arith.constant dense<0.000000e+00> : vector<8x256xf32>
    %46 = tpu.matmul %42, %9, %cst_32 {dimension_numbers = #tpu.dot_dimension_numbers<[1], [0], [0], [1], [0, 0, 1, 1], [], []>} : vector<8x128xbf16>, vector<128x256xbf16>, vector<8x256xf32> -> vector<8x256xf32>
    %47 = vector.extract_strided_slice %46 {offsets = [0, 0], sizes = [8, 128], strides = [1, 1]} : vector<8x256xf32> to vector<8x128xf32>
    %48 = vector.broadcast %12 : vector<1x128xf32> to vector<8x128xf32>
    %49 = arith.mulf %48, %17 : vector<8x128xf32>
    %50 = vector.extract_strided_slice %46 {offsets = [0, 128], sizes = [8, 128], strides = [1, 1]} : vector<8x256xf32> to vector<8x128xf32>
    %51 = arith.addf %49, %50 : vector<8x128xf32>
    %52 = vector.broadcast %cst_26 : f32 to vector<8x128xf32>
    %53 = arith.mulf %51, %52 : vector<8x128xf32>
    %54 = math.roundeven %53 : vector<8x128xf32>
    %55 = vector.broadcast %cst_27 : f32 to vector<8x128xf32>
    %56 = arith.mulf %54, %55 : vector<8x128xf32>
    %57 = arith.index_cast %c0_i32_28 : i32 to index
    %c0_33 = arith.constant 0 : index
    %c0_34 = arith.constant 0 : index
    %58 = vector.load %arg6[%57, %c0_33, %c0_34] : memref<8x8x128xf32, #tpu.memory_space<vmem>>, vector<1x8x128xf32>
    %59 = vector.shape_cast %58 : vector<1x8x128xf32> to vector<8x128xf32>
    %60 = vector.shape_cast %56 : vector<8x128xf32> to vector<1x8x128xf32>
    tpu.vector_store %arg6[%57, %c0_33, %c0_34], %60 {strides = array<i32>} : memref<8x8x128xf32, #tpu.memory_space<vmem>>, vector<1x8x128xf32>,
    %c1_i32 = arith.constant 1 : i32
    %c8_i32_35 = arith.constant 8 : i32
    %61 = arith.muli %c1_i32, %c8_i32_35 : i32
    %62 = tpu.assume_multiple %61, 8 : i32
    %63 = arith.index_cast %62 : i32 to index
    %c0_36 = arith.constant 0 : index
    %64 = vector.load %arg13[%63, %c0_36] : memref<64x128xf32, #tpu.memory_space<vmem>>, vector<8x128xf32>
    %65 = vector.broadcast %10 : vector<1x128xf32> to vector<8x128xf32>
    %66 = arith.mulf %65, %30 : vector<8x128xf32>
    %67 = vector.broadcast %11 : vector<1x128xf32> to vector<8x128xf32>
    %68 = arith.mulf %67, %35 : vector<8x128xf32>
    %69 = arith.subf %66, %68 : vector<8x128xf32>
    %70 = arith.addf %64, %47 : vector<8x128xf32>
    %71 = arith.addf %69, %70 : vector<8x128xf32>
    %72 = vector.broadcast %10 : vector<1x128xf32> to vector<8x128xf32>
    %73 = arith.mulf %72, %35 : vector<8x128xf32>
    %74 = vector.broadcast %11 : vector<1x128xf32> to vector<8x128xf32>
    %75 = arith.mulf %74, %30 : vector<8x128xf32>
    %76 = arith.addf %73, %75 : vector<8x128xf32>
    %cst_37 = arith.constant 1.000000e+00 : f32
    %77 = vector.broadcast %cst_37 : f32 to vector<8x128xf32>
    %78 = arith.subf %71, %77 : vector<8x128xf32>
    %cst_38 = arith.constant 0.000000e+00 : f32
    %79 = vector.broadcast %cst_38 : f32 to vector<8x128xf32>
    %80 = arith.cmpf ogt, %78, %79 : vector<8x128xf32>
    %81 = arith.extui %80 : vector<8x128xi1> to vector<8x128xi32>
    %82 = arith.sitofp %81 : vector<8x128xi32> to vector<8x128xf32>
    %83 = arith.truncf %82 : vector<8x128xf32> to vector<8x128xbf16>
    %84 = arith.extui %80 : vector<8x128xi1> to vector<8x128xi32>
    %85 = arith.sitofp %84 : vector<8x128xi32> to vector<8x128xf32>
    %86 = arith.addf %45, %85 : vector<8x128xf32>
    %cst_39 = arith.constant dense<0.000000e+00> : vector<8x256xf32>
    %87 = tpu.matmul %83, %9, %cst_39 {dimension_numbers = #tpu.dot_dimension_numbers<[1], [0], [0], [1], [0, 0, 1, 1], [], []>} : vector<8x128xbf16>, vector<128x256xbf16>, vector<8x256xf32> -> vector<8x256xf32>
    %88 = vector.extract_strided_slice %87 {offsets = [0, 0], sizes = [8, 128], strides = [1, 1]} : vector<8x256xf32> to vector<8x128xf32>
    %89 = vector.broadcast %12 : vector<1x128xf32> to vector<8x128xf32>
    %90 = arith.mulf %89, %56 : vector<8x128xf32>
    %91 = vector.extract_strided_slice %87 {offsets = [0, 128], sizes = [8, 128], strides = [1, 1]} : vector<8x256xf32> to vector<8x128xf32>
    %92 = arith.addf %90, %91 : vector<8x128xf32>
    %93 = vector.broadcast %cst_26 : f32 to vector<8x128xf32>
    %94 = arith.mulf %92, %93 : vector<8x128xf32>
    %95 = math.roundeven %94 : vector<8x128xf32>
    %96 = vector.broadcast %cst_27 : f32 to vector<8x128xf32>
    %97 = arith.mulf %95, %96 : vector<8x128xf32>
    %98 = arith.index_cast %c1_i32 : i32 to index
    %c0_40 = arith.constant 0 : index
    %c0_41 = arith.constant 0 : index
    %99 = vector.load %arg6[%98, %c0_40, %c0_41] : memref<8x8x128xf32, #tpu.memory_space<vmem>>, vector<1x8x128xf32>
    %100 = vector.shape_cast %99 : vector<1x8x128xf32> to vector<8x128xf32>
    %101 = vector.shape_cast %97 : vector<8x128xf32> to vector<1x8x128xf32>
    tpu.vector_store %arg6[%98, %c0_40, %c0_41], %101 {strides = array<i32>} : memref<8x8x128xf32, #tpu.memory_space<vmem>>, vector<1x8x128xf32>,
    %c2_i32 = arith.constant 2 : i32
    %c8_i32_42 = arith.constant 8 : i32
    %102 = arith.muli %c2_i32, %c8_i32_42 : i32
    %103 = tpu.assume_multiple %102, 8 : i32
    %104 = arith.index_cast %103 : i32 to index
    %c0_43 = arith.constant 0 : index
    %105 = vector.load %arg13[%104, %c0_43] : memref<64x128xf32, #tpu.memory_space<vmem>>, vector<8x128xf32>
    %106 = vector.broadcast %10 : vector<1x128xf32> to vector<8x128xf32>
    %107 = arith.mulf %106, %71 : vector<8x128xf32>
    %108 = vector.broadcast %11 : vector<1x128xf32> to vector<8x128xf32>
    %109 = arith.mulf %108, %76 : vector<8x128xf32>
    %110 = arith.subf %107, %109 : vector<8x128xf32>
    %111 = arith.addf %105, %88 : vector<8x128xf32>
    %112 = arith.addf %110, %111 : vector<8x128xf32>
    %113 = vector.broadcast %10 : vector<1x128xf32> to vector<8x128xf32>
    %114 = arith.mulf %113, %76 : vector<8x128xf32>
    %115 = vector.broadcast %11 : vector<1x128xf32> to vector<8x128xf32>
    %116 = arith.mulf %115, %71 : vector<8x128xf32>
    %117 = arith.addf %114, %116 : vector<8x128xf32>
    %cst_44 = arith.constant 1.000000e+00 : f32
    %118 = vector.broadcast %cst_44 : f32 to vector<8x128xf32>
    %119 = arith.subf %112, %118 : vector<8x128xf32>
    %cst_45 = arith.constant 0.000000e+00 : f32
    %120 = vector.broadcast %cst_45 : f32 to vector<8x128xf32>
    %121 = arith.cmpf ogt, %119, %120 : vector<8x128xf32>
    %122 = arith.extui %121 : vector<8x128xi1> to vector<8x128xi32>
    %123 = arith.sitofp %122 : vector<8x128xi32> to vector<8x128xf32>
    %124 = arith.truncf %123 : vector<8x128xf32> to vector<8x128xbf16>
    %125 = arith.extui %121 : vector<8x128xi1> to vector<8x128xi32>
    %126 = arith.sitofp %125 : vector<8x128xi32> to vector<8x128xf32>
    %127 = arith.addf %86, %126 : vector<8x128xf32>
    %cst_46 = arith.constant dense<0.000000e+00> : vector<8x256xf32>
    %128 = tpu.matmul %124, %9, %cst_46 {dimension_numbers = #tpu.dot_dimension_numbers<[1], [0], [0], [1], [0, 0, 1, 1], [], []>} : vector<8x128xbf16>, vector<128x256xbf16>, vector<8x256xf32> -> vector<8x256xf32>
    %129 = vector.extract_strided_slice %128 {offsets = [0, 0], sizes = [8, 128], strides = [1, 1]} : vector<8x256xf32> to vector<8x128xf32>
    %130 = vector.broadcast %12 : vector<1x128xf32> to vector<8x128xf32>
    %131 = arith.mulf %130, %97 : vector<8x128xf32>
    %132 = vector.extract_strided_slice %128 {offsets = [0, 128], sizes = [8, 128], strides = [1, 1]} : vector<8x256xf32> to vector<8x128xf32>
    %133 = arith.addf %131, %132 : vector<8x128xf32>
    %134 = vector.broadcast %cst_26 : f32 to vector<8x128xf32>
    %135 = arith.mulf %133, %134 : vector<8x128xf32>
    %136 = math.roundeven %135 : vector<8x128xf32>
    %137 = vector.broadcast %cst_27 : f32 to vector<8x128xf32>
    %138 = arith.mulf %136, %137 : vector<8x128xf32>
    %139 = arith.index_cast %c2_i32 : i32 to index
    %c0_47 = arith.constant 0 : index
    %c0_48 = arith.constant 0 : index
    %140 = vector.load %arg6[%139, %c0_47, %c0_48] : memref<8x8x128xf32, #tpu.memory_space<vmem>>, vector<1x8x128xf32>
    %141 = vector.shape_cast %140 : vector<1x8x128xf32> to vector<8x128xf32>
    %142 = vector.shape_cast %138 : vector<8x128xf32> to vector<1x8x128xf32>
    tpu.vector_store %arg6[%139, %c0_47, %c0_48], %142 {strides = array<i32>} : memref<8x8x128xf32, #tpu.memory_space<vmem>>, vector<1x8x128xf32>,
    %c3_i32 = arith.constant 3 : i32
    %c8_i32_49 = arith.constant 8 : i32
    %143 = arith.muli %c3_i32, %c8_i32_49 : i32
    %144 = tpu.assume_multiple %143, 8 : i32
    %145 = arith.index_cast %144 : i32 to index
    %c0_50 = arith.constant 0 : index
    %146 = vector.load %arg13[%145, %c0_50] : memref<64x128xf32, #tpu.memory_space<vmem>>, vector<8x128xf32>
    %147 = vector.broadcast %10 : vector<1x128xf32> to vector<8x128xf32>
    %148 = arith.mulf %147, %112 : vector<8x128xf32>
    %149 = vector.broadcast %11 : vector<1x128xf32> to vector<8x128xf32>
    %150 = arith.mulf %149, %117 : vector<8x128xf32>
    %151 = arith.subf %148, %150 : vector<8x128xf32>
    %152 = arith.addf %146, %129 : vector<8x128xf32>
    %153 = arith.addf %151, %152 : vector<8x128xf32>
    %154 = vector.broadcast %10 : vector<1x128xf32> to vector<8x128xf32>
    %155 = arith.mulf %154, %117 : vector<8x128xf32>
    %156 = vector.broadcast %11 : vector<1x128xf32> to vector<8x128xf32>
    %157 = arith.mulf %156, %112 : vector<8x128xf32>
    %158 = arith.addf %155, %157 : vector<8x128xf32>
    %cst_51 = arith.constant 1.000000e+00 : f32
    %159 = vector.broadcast %cst_51 : f32 to vector<8x128xf32>
    %160 = arith.subf %153, %159 : vector<8x128xf32>
    %cst_52 = arith.constant 0.000000e+00 : f32
    %161 = vector.broadcast %cst_52 : f32 to vector<8x128xf32>
    %162 = arith.cmpf ogt, %160, %161 : vector<8x128xf32>
    %163 = arith.extui %162 : vector<8x128xi1> to vector<8x128xi32>
    %164 = arith.sitofp %163 : vector<8x128xi32> to vector<8x128xf32>
    %165 = arith.truncf %164 : vector<8x128xf32> to vector<8x128xbf16>
    %166 = arith.extui %162 : vector<8x128xi1> to vector<8x128xi32>
    %167 = arith.sitofp %166 : vector<8x128xi32> to vector<8x128xf32>
    %168 = arith.addf %127, %167 : vector<8x128xf32>
    %cst_53 = arith.constant dense<0.000000e+00> : vector<8x256xf32>
    %169 = tpu.matmul %165, %9, %cst_53 {dimension_numbers = #tpu.dot_dimension_numbers<[1], [0], [0], [1], [0, 0, 1, 1], [], []>} : vector<8x128xbf16>, vector<128x256xbf16>, vector<8x256xf32> -> vector<8x256xf32>
    %170 = vector.extract_strided_slice %169 {offsets = [0, 0], sizes = [8, 128], strides = [1, 1]} : vector<8x256xf32> to vector<8x128xf32>
    %171 = vector.broadcast %12 : vector<1x128xf32> to vector<8x128xf32>
    %172 = arith.mulf %171, %138 : vector<8x128xf32>
    %173 = vector.extract_strided_slice %169 {offsets = [0, 128], sizes = [8, 128], strides = [1, 1]} : vector<8x256xf32> to vector<8x128xf32>
    %174 = arith.addf %172, %173 : vector<8x128xf32>
    %175 = vector.broadcast %cst_26 : f32 to vector<8x128xf32>
    %176 = arith.mulf %174, %175 : vector<8x128xf32>
    %177 = math.roundeven %176 : vector<8x128xf32>
    %178 = vector.broadcast %cst_27 : f32 to vector<8x128xf32>
    %179 = arith.mulf %177, %178 : vector<8x128xf32>
    %180 = arith.index_cast %c3_i32 : i32 to index
    %c0_54 = arith.constant 0 : index
    %c0_55 = arith.constant 0 : index
    %181 = vector.load %arg6[%180, %c0_54, %c0_55] : memref<8x8x128xf32, #tpu.memory_space<vmem>>, vector<1x8x128xf32>
    %182 = vector.shape_cast %181 : vector<1x8x128xf32> to vector<8x128xf32>
    %183 = vector.shape_cast %179 : vector<8x128xf32> to vector<1x8x128xf32>
    tpu.vector_store %arg6[%180, %c0_54, %c0_55], %183 {strides = array<i32>} : memref<8x8x128xf32, #tpu.memory_space<vmem>>, vector<1x8x128xf32>,
    %c4_i32 = arith.constant 4 : i32
    %c8_i32_56 = arith.constant 8 : i32
    %184 = arith.muli %c4_i32, %c8_i32_56 : i32
    %185 = tpu.assume_multiple %184, 8 : i32
    %186 = arith.index_cast %185 : i32 to index
    %c0_57 = arith.constant 0 : index
    %187 = vector.load %arg13[%186, %c0_57] : memref<64x128xf32, #tpu.memory_space<vmem>>, vector<8x128xf32>
    %188 = vector.broadcast %10 : vector<1x128xf32> to vector<8x128xf32>
    %189 = arith.mulf %188, %153 : vector<8x128xf32>
    %190 = vector.broadcast %11 : vector<1x128xf32> to vector<8x128xf32>
    %191 = arith.mulf %190, %158 : vector<8x128xf32>
    %192 = arith.subf %189, %191 : vector<8x128xf32>
    %193 = arith.addf %187, %170 : vector<8x128xf32>
    %194 = arith.addf %192, %193 : vector<8x128xf32>
    %195 = vector.broadcast %10 : vector<1x128xf32> to vector<8x128xf32>
    %196 = arith.mulf %195, %158 : vector<8x128xf32>
    %197 = vector.broadcast %11 : vector<1x128xf32> to vector<8x128xf32>
    %198 = arith.mulf %197, %153 : vector<8x128xf32>
    %199 = arith.addf %196, %198 : vector<8x128xf32>
    %cst_58 = arith.constant 1.000000e+00 : f32
    %200 = vector.broadcast %cst_58 : f32 to vector<8x128xf32>
    %201 = arith.subf %194, %200 : vector<8x128xf32>
    %cst_59 = arith.constant 0.000000e+00 : f32
    %202 = vector.broadcast %cst_59 : f32 to vector<8x128xf32>
    %203 = arith.cmpf ogt, %201, %202 : vector<8x128xf32>
    %204 = arith.extui %203 : vector<8x128xi1> to vector<8x128xi32>
    %205 = arith.sitofp %204 : vector<8x128xi32> to vector<8x128xf32>
    %206 = arith.truncf %205 : vector<8x128xf32> to vector<8x128xbf16>
    %207 = arith.extui %203 : vector<8x128xi1> to vector<8x128xi32>
    %208 = arith.sitofp %207 : vector<8x128xi32> to vector<8x128xf32>
    %209 = arith.addf %168, %208 : vector<8x128xf32>
    %cst_60 = arith.constant dense<0.000000e+00> : vector<8x256xf32>
    %210 = tpu.matmul %206, %9, %cst_60 {dimension_numbers = #tpu.dot_dimension_numbers<[1], [0], [0], [1], [0, 0, 1, 1], [], []>} : vector<8x128xbf16>, vector<128x256xbf16>, vector<8x256xf32> -> vector<8x256xf32>
    %211 = vector.extract_strided_slice %210 {offsets = [0, 0], sizes = [8, 128], strides = [1, 1]} : vector<8x256xf32> to vector<8x128xf32>
    %212 = vector.broadcast %12 : vector<1x128xf32> to vector<8x128xf32>
    %213 = arith.mulf %212, %179 : vector<8x128xf32>
    %214 = vector.extract_strided_slice %210 {offsets = [0, 128], sizes = [8, 128], strides = [1, 1]} : vector<8x256xf32> to vector<8x128xf32>
    %215 = arith.addf %213, %214 : vector<8x128xf32>
    %216 = vector.broadcast %cst_26 : f32 to vector<8x128xf32>
    %217 = arith.mulf %215, %216 : vector<8x128xf32>
    %218 = math.roundeven %217 : vector<8x128xf32>
    %219 = vector.broadcast %cst_27 : f32 to vector<8x128xf32>
    %220 = arith.mulf %218, %219 : vector<8x128xf32>
    %221 = arith.index_cast %c4_i32 : i32 to index
    %c0_61 = arith.constant 0 : index
    %c0_62 = arith.constant 0 : index
    %222 = vector.load %arg6[%221, %c0_61, %c0_62] : memref<8x8x128xf32, #tpu.memory_space<vmem>>, vector<1x8x128xf32>
    %223 = vector.shape_cast %222 : vector<1x8x128xf32> to vector<8x128xf32>
    %224 = vector.shape_cast %220 : vector<8x128xf32> to vector<1x8x128xf32>
    tpu.vector_store %arg6[%221, %c0_61, %c0_62], %224 {strides = array<i32>} : memref<8x8x128xf32, #tpu.memory_space<vmem>>, vector<1x8x128xf32>,
    %c5_i32 = arith.constant 5 : i32
    %c8_i32_63 = arith.constant 8 : i32
    %225 = arith.muli %c5_i32, %c8_i32_63 : i32
    %226 = tpu.assume_multiple %225, 8 : i32
    %227 = arith.index_cast %226 : i32 to index
    %c0_64 = arith.constant 0 : index
    %228 = vector.load %arg13[%227, %c0_64] : memref<64x128xf32, #tpu.memory_space<vmem>>, vector<8x128xf32>
    %229 = vector.broadcast %10 : vector<1x128xf32> to vector<8x128xf32>
    %230 = arith.mulf %229, %194 : vector<8x128xf32>
    %231 = vector.broadcast %11 : vector<1x128xf32> to vector<8x128xf32>
    %232 = arith.mulf %231, %199 : vector<8x128xf32>
    %233 = arith.subf %230, %232 : vector<8x128xf32>
    %234 = arith.addf %228, %211 : vector<8x128xf32>
    %235 = arith.addf %233, %234 : vector<8x128xf32>
    %236 = vector.broadcast %10 : vector<1x128xf32> to vector<8x128xf32>
    %237 = arith.mulf %236, %199 : vector<8x128xf32>
    %238 = vector.broadcast %11 : vector<1x128xf32> to vector<8x128xf32>
    %239 = arith.mulf %238, %194 : vector<8x128xf32>
    %240 = arith.addf %237, %239 : vector<8x128xf32>
    %cst_65 = arith.constant 1.000000e+00 : f32
    %241 = vector.broadcast %cst_65 : f32 to vector<8x128xf32>
    %242 = arith.subf %235, %241 : vector<8x128xf32>
    %cst_66 = arith.constant 0.000000e+00 : f32
    %243 = vector.broadcast %cst_66 : f32 to vector<8x128xf32>
    %244 = arith.cmpf ogt, %242, %243 : vector<8x128xf32>
    %245 = arith.extui %244 : vector<8x128xi1> to vector<8x128xi32>
    %246 = arith.sitofp %245 : vector<8x128xi32> to vector<8x128xf32>
    %247 = arith.truncf %246 : vector<8x128xf32> to vector<8x128xbf16>
    %248 = arith.extui %244 : vector<8x128xi1> to vector<8x128xi32>
    %249 = arith.sitofp %248 : vector<8x128xi32> to vector<8x128xf32>
    %250 = arith.addf %209, %249 : vector<8x128xf32>
    %cst_67 = arith.constant dense<0.000000e+00> : vector<8x256xf32>
    %251 = tpu.matmul %247, %9, %cst_67 {dimension_numbers = #tpu.dot_dimension_numbers<[1], [0], [0], [1], [0, 0, 1, 1], [], []>} : vector<8x128xbf16>, vector<128x256xbf16>, vector<8x256xf32> -> vector<8x256xf32>
    %252 = vector.extract_strided_slice %251 {offsets = [0, 0], sizes = [8, 128], strides = [1, 1]} : vector<8x256xf32> to vector<8x128xf32>
    %253 = vector.broadcast %12 : vector<1x128xf32> to vector<8x128xf32>
    %254 = arith.mulf %253, %220 : vector<8x128xf32>
    %255 = vector.extract_strided_slice %251 {offsets = [0, 128], sizes = [8, 128], strides = [1, 1]} : vector<8x256xf32> to vector<8x128xf32>
    %256 = arith.addf %254, %255 : vector<8x128xf32>
    %257 = vector.broadcast %cst_26 : f32 to vector<8x128xf32>
    %258 = arith.mulf %256, %257 : vector<8x128xf32>
    %259 = math.roundeven %258 : vector<8x128xf32>
    %260 = vector.broadcast %cst_27 : f32 to vector<8x128xf32>
    %261 = arith.mulf %259, %260 : vector<8x128xf32>
    %262 = arith.index_cast %c5_i32 : i32 to index
    %c0_68 = arith.constant 0 : index
    %c0_69 = arith.constant 0 : index
    %263 = vector.load %arg6[%262, %c0_68, %c0_69] : memref<8x8x128xf32, #tpu.memory_space<vmem>>, vector<1x8x128xf32>
    %264 = vector.shape_cast %263 : vector<1x8x128xf32> to vector<8x128xf32>
    %265 = vector.shape_cast %261 : vector<8x128xf32> to vector<1x8x128xf32>
    tpu.vector_store %arg6[%262, %c0_68, %c0_69], %265 {strides = array<i32>} : memref<8x8x128xf32, #tpu.memory_space<vmem>>, vector<1x8x128xf32>,
    %c6_i32 = arith.constant 6 : i32
    %c8_i32_70 = arith.constant 8 : i32
    %266 = arith.muli %c6_i32, %c8_i32_70 : i32
    %267 = tpu.assume_multiple %266, 8 : i32
    %268 = arith.index_cast %267 : i32 to index
    %c0_71 = arith.constant 0 : index
    %269 = vector.load %arg13[%268, %c0_71] : memref<64x128xf32, #tpu.memory_space<vmem>>, vector<8x128xf32>
    %270 = vector.broadcast %10 : vector<1x128xf32> to vector<8x128xf32>
    %271 = arith.mulf %270, %235 : vector<8x128xf32>
    %272 = vector.broadcast %11 : vector<1x128xf32> to vector<8x128xf32>
    %273 = arith.mulf %272, %240 : vector<8x128xf32>
    %274 = arith.subf %271, %273 : vector<8x128xf32>
    %275 = arith.addf %269, %252 : vector<8x128xf32>
    %276 = arith.addf %274, %275 : vector<8x128xf32>
    %277 = vector.broadcast %10 : vector<1x128xf32> to vector<8x128xf32>
    %278 = arith.mulf %277, %240 : vector<8x128xf32>
    %279 = vector.broadcast %11 : vector<1x128xf32> to vector<8x128xf32>
    %280 = arith.mulf %279, %235 : vector<8x128xf32>
    %281 = arith.addf %278, %280 : vector<8x128xf32>
    %cst_72 = arith.constant 1.000000e+00 : f32
    %282 = vector.broadcast %cst_72 : f32 to vector<8x128xf32>
    %283 = arith.subf %276, %282 : vector<8x128xf32>
    %cst_73 = arith.constant 0.000000e+00 : f32
    %284 = vector.broadcast %cst_73 : f32 to vector<8x128xf32>
    %285 = arith.cmpf ogt, %283, %284 : vector<8x128xf32>
    %286 = arith.extui %285 : vector<8x128xi1> to vector<8x128xi32>
    %287 = arith.sitofp %286 : vector<8x128xi32> to vector<8x128xf32>
    %288 = arith.truncf %287 : vector<8x128xf32> to vector<8x128xbf16>
    %289 = arith.extui %285 : vector<8x128xi1> to vector<8x128xi32>
    %290 = arith.sitofp %289 : vector<8x128xi32> to vector<8x128xf32>
    %291 = arith.addf %250, %290 : vector<8x128xf32>
    %cst_74 = arith.constant dense<0.000000e+00> : vector<8x256xf32>
    %292 = tpu.matmul %288, %9, %cst_74 {dimension_numbers = #tpu.dot_dimension_numbers<[1], [0], [0], [1], [0, 0, 1, 1], [], []>} : vector<8x128xbf16>, vector<128x256xbf16>, vector<8x256xf32> -> vector<8x256xf32>
    %293 = vector.extract_strided_slice %292 {offsets = [0, 0], sizes = [8, 128], strides = [1, 1]} : vector<8x256xf32> to vector<8x128xf32>
    %294 = vector.broadcast %12 : vector<1x128xf32> to vector<8x128xf32>
    %295 = arith.mulf %294, %261 : vector<8x128xf32>
    %296 = vector.extract_strided_slice %292 {offsets = [0, 128], sizes = [8, 128], strides = [1, 1]} : vector<8x256xf32> to vector<8x128xf32>
    %297 = arith.addf %295, %296 : vector<8x128xf32>
    %298 = vector.broadcast %cst_26 : f32 to vector<8x128xf32>
    %299 = arith.mulf %297, %298 : vector<8x128xf32>
    %300 = math.roundeven %299 : vector<8x128xf32>
    %301 = vector.broadcast %cst_27 : f32 to vector<8x128xf32>
    %302 = arith.mulf %300, %301 : vector<8x128xf32>
    %303 = arith.index_cast %c6_i32 : i32 to index
    %c0_75 = arith.constant 0 : index
    %c0_76 = arith.constant 0 : index
    %304 = vector.load %arg6[%303, %c0_75, %c0_76] : memref<8x8x128xf32, #tpu.memory_space<vmem>>, vector<1x8x128xf32>
    %305 = vector.shape_cast %304 : vector<1x8x128xf32> to vector<8x128xf32>
    %306 = vector.shape_cast %302 : vector<8x128xf32> to vector<1x8x128xf32>
    tpu.vector_store %arg6[%303, %c0_75, %c0_76], %306 {strides = array<i32>} : memref<8x8x128xf32, #tpu.memory_space<vmem>>, vector<1x8x128xf32>,
    %c7_i32 = arith.constant 7 : i32
    %c8_i32_77 = arith.constant 8 : i32
    %307 = arith.muli %c7_i32, %c8_i32_77 : i32
    %308 = tpu.assume_multiple %307, 8 : i32
    %309 = arith.index_cast %308 : i32 to index
    %c0_78 = arith.constant 0 : index
    %310 = vector.load %arg13[%309, %c0_78] : memref<64x128xf32, #tpu.memory_space<vmem>>, vector<8x128xf32>
    %311 = vector.broadcast %10 : vector<1x128xf32> to vector<8x128xf32>
    %312 = arith.mulf %311, %276 : vector<8x128xf32>
    %313 = vector.broadcast %11 : vector<1x128xf32> to vector<8x128xf32>
    %314 = arith.mulf %313, %281 : vector<8x128xf32>
    %315 = arith.subf %312, %314 : vector<8x128xf32>
    %316 = arith.addf %310, %293 : vector<8x128xf32>
    %317 = arith.addf %315, %316 : vector<8x128xf32>
    %318 = vector.broadcast %10 : vector<1x128xf32> to vector<8x128xf32>
    %319 = arith.mulf %318, %281 : vector<8x128xf32>
    %320 = vector.broadcast %11 : vector<1x128xf32> to vector<8x128xf32>
    %321 = arith.mulf %320, %276 : vector<8x128xf32>
    %322 = arith.addf %319, %321 : vector<8x128xf32>
    %cst_79 = arith.constant 1.000000e+00 : f32
    %323 = vector.broadcast %cst_79 : f32 to vector<8x128xf32>
    %324 = arith.subf %317, %323 : vector<8x128xf32>
    %cst_80 = arith.constant 0.000000e+00 : f32
    %325 = vector.broadcast %cst_80 : f32 to vector<8x128xf32>
    %326 = arith.cmpf ogt, %324, %325 : vector<8x128xf32>
    %327 = arith.extui %326 : vector<8x128xi1> to vector<8x128xi32>
    %328 = arith.sitofp %327 : vector<8x128xi32> to vector<8x128xf32>
    %329 = arith.truncf %328 : vector<8x128xf32> to vector<8x128xbf16>
    %330 = arith.extui %326 : vector<8x128xi1> to vector<8x128xi32>
    %331 = arith.sitofp %330 : vector<8x128xi32> to vector<8x128xf32>
    %332 = arith.addf %291, %331 : vector<8x128xf32>
    %cst_81 = arith.constant dense<0.000000e+00> : vector<8x256xf32>
    %333 = tpu.matmul %329, %9, %cst_81 {dimension_numbers = #tpu.dot_dimension_numbers<[1], [0], [0], [1], [0, 0, 1, 1], [], []>} : vector<8x128xbf16>, vector<128x256xbf16>, vector<8x256xf32> -> vector<8x256xf32>
    %334 = vector.extract_strided_slice %333 {offsets = [0, 0], sizes = [8, 128], strides = [1, 1]} : vector<8x256xf32> to vector<8x128xf32>
    %335 = vector.broadcast %12 : vector<1x128xf32> to vector<8x128xf32>
    %336 = arith.mulf %335, %302 : vector<8x128xf32>
    %337 = vector.extract_strided_slice %333 {offsets = [0, 128], sizes = [8, 128], strides = [1, 1]} : vector<8x256xf32> to vector<8x128xf32>
    %338 = arith.addf %336, %337 : vector<8x128xf32>
    %339 = vector.broadcast %cst_26 : f32 to vector<8x128xf32>
    %340 = arith.mulf %338, %339 : vector<8x128xf32>
    %341 = math.roundeven %340 : vector<8x128xf32>
    %342 = vector.broadcast %cst_27 : f32 to vector<8x128xf32>
    %343 = arith.mulf %341, %342 : vector<8x128xf32>
    %344 = arith.index_cast %c7_i32 : i32 to index
    %c0_82 = arith.constant 0 : index
    %c0_83 = arith.constant 0 : index
    %345 = vector.load %arg6[%344, %c0_82, %c0_83] : memref<8x8x128xf32, #tpu.memory_space<vmem>>, vector<1x8x128xf32>
    %346 = vector.shape_cast %345 : vector<1x8x128xf32> to vector<8x128xf32>
    %347 = vector.shape_cast %343 : vector<8x128xf32> to vector<1x8x128xf32>
    tpu.vector_store %arg6[%344, %c0_82, %c0_83], %347 {strides = array<i32>} : memref<8x8x128xf32, #tpu.memory_space<vmem>>, vector<1x8x128xf32>,
    %c8_i32_84 = arith.constant 8 : i32
    %348 = arith.extf %329 : vector<8x128xbf16> to vector<8x128xf32>
    %c0_85 = arith.constant 0 : index
    %c0_86 = arith.constant 0 : index
    %349 = vector.load %arg7[%c0_85, %c0_86] : memref<8x128xf32, #tpu.memory_space<vmem>>, vector<8x128xf32>
    tpu.vector_store %arg7[%c0_85, %c0_86], %348 {strides = array<i32>} : memref<8x128xf32, #tpu.memory_space<vmem>>, vector<8x128xf32>,
    %c0_87 = arith.constant 0 : index
    %c0_88 = arith.constant 0 : index
    %350 = vector.load %arg8[%c0_87, %c0_88] : memref<8x128xf32, #tpu.memory_space<vmem>>, vector<8x128xf32>
    tpu.vector_store %arg8[%c0_87, %c0_88], %317 {strides = array<i32>} : memref<8x128xf32, #tpu.memory_space<vmem>>, vector<8x128xf32>,
    %c0_89 = arith.constant 0 : index
    %c0_90 = arith.constant 0 : index
    %351 = vector.load %arg9[%c0_89, %c0_90] : memref<8x128xf32, #tpu.memory_space<vmem>>, vector<8x128xf32>
    tpu.vector_store %arg9[%c0_89, %c0_90], %343 {strides = array<i32>} : memref<8x128xf32, #tpu.memory_space<vmem>>, vector<8x128xf32>,
    %c0_91 = arith.constant 0 : index
    %c0_92 = arith.constant 0 : index
    %352 = vector.load %arg14[%c0_91, %c0_92] : memref<8x128xf32, #tpu.memory_space<vmem>>, vector<8x128xf32>
    tpu.vector_store %arg14[%c0_91, %c0_92], %322 {strides = array<i32>} : memref<8x128xf32, #tpu.memory_space<vmem>>, vector<8x128xf32>,
    %c0_93 = arith.constant 0 : index
    %c0_94 = arith.constant 0 : index
    %353 = vector.load %arg15[%c0_93, %c0_94] : memref<8x128xf32, #tpu.memory_space<vmem>>, vector<8x128xf32>
    tpu.vector_store %arg15[%c0_93, %c0_94], %334 {strides = array<i32>} : memref<8x128xf32, #tpu.memory_space<vmem>>, vector<8x128xf32>,
    %c0_95 = arith.constant 0 : index
    %c0_96 = arith.constant 0 : index
    %354 = vector.load %arg16[%c0_95, %c0_96] : memref<8x128xf32, #tpu.memory_space<vmem>>, vector<8x128xf32>
    tpu.vector_store %arg16[%c0_95, %c0_96], %332 {strides = array<i32>} : memref<8x128xf32, #tpu.memory_space<vmem>>, vector<8x128xf32>,
    %c0_i32_97 = arith.constant 0 : i32
    %355 = arith.cmpi eq, %arg0, %c0_i32_97 : i32
    %356 = arith.extui %355 : i1 to i32
    %c0_i32_98 = arith.constant 0 : i32
    %357 = arith.cmpi ne, %356, %c0_i32_98 : i32
    scf.if %357 {
      %358 = vector.shape_cast %332 : vector<8x128xf32> to vector<1x8x128xf32>
      %cst_99 = arith.constant dense<0.000000e+00> : vector<1xf32>
      %359 = vector.multi_reduction <add>, %358, %cst_99 [1, 2] : vector<1x8x128xf32> to vector<1xf32>
      %360 = vector.shape_cast %359 : vector<1xf32> to vector<1x1x1xf32>
      %361 = vector.extract %360[0, 0, 0] : f32 from vector<1x1x1xf32>
      %362 = vector.broadcast %361 : f32 to vector<1x1xf32>
      %c0_100 = arith.constant 0 : index
      %c0_101 = arith.constant 0 : index
      %363 = vector.load %arg10[%c0_100, %c0_101] : memref<1x1xf32, #tpu.memory_space<vmem>>, vector<1x1xf32>
      tpu.vector_store %arg10[%c0_100, %c0_101], %362 {strides = array<i32>} : memref<1x1xf32, #tpu.memory_space<vmem>>, vector<1x1xf32>,
    } else {
    }
    return
  }
  func.func @transform_0(%arg0: i32) -> (i32, i32, i32) {
    %c0_i32 = arith.constant 0 : i32
    %c0_i32_0 = arith.constant 0 : i32
    %c0_i32_1 = arith.constant 0 : i32
    return %arg0, %c0_i32, %c0_i32_0 : i32, i32, i32
  }
  func.func @transform_1(%arg0: i32) -> (i32, i32) {
    %c0_i32 = arith.constant 0 : i32
    %c0_i32_0 = arith.constant 0 : i32
    %c0_i32_1 = arith.constant 0 : i32
    return %c0_i32, %c0_i32_0 : i32, i32
  }
  func.func @transform_3(%arg0: i32) -> (i32, i32) {
    %c0_i32 = arith.constant 0 : i32
    %c0_i32_0 = arith.constant 0 : i32
    %c0_i32_1 = arith.constant 0 : i32
    return %c0_i32, %c0_i32_0 : i32, i32
  }
  func.func @transform_4(%arg0: i32) -> (i32, i32) {
    %c0_i32 = arith.constant 0 : i32
    %c0_i32_0 = arith.constant 0 : i32
    %c0_i32_1 = arith.constant 0 : i32
    return %c0_i32, %c0_i32_0 : i32, i32
  }
  func.func @transform_5(%arg0: i32) -> (i32, i32, i32) {
    %c0_i32 = arith.constant 0 : i32
    %c0_i32_0 = arith.constant 0 : i32
    %c0_i32_1 = arith.constant 0 : i32
    return %arg0, %c0_i32, %c0_i32_0 : i32, i32, i32
  }
  func.func @transform_6(%arg0: i32) -> (i32, i32) {
    %c0_i32 = arith.constant 0 : i32
    %c0_i32_0 = arith.constant 0 : i32
    %c0_i32_1 = arith.constant 0 : i32
    return %c0_i32, %c0_i32_0 : i32, i32
  }
  func.func @transform_7(%arg0: i32) -> (i32, i32) {
    %c0_i32 = arith.constant 0 : i32
    %c0_i32_0 = arith.constant 0 : i32
    %c0_i32_1 = arith.constant 0 : i32
    return %c0_i32, %c0_i32_0 : i32, i32
  }
  func.func @transform_8(%arg0: i32) -> (i32, i32) {
    %c0_i32 = arith.constant 0 : i32
    %c0_i32_0 = arith.constant 0 : i32
    %c0_i32_1 = arith.constant 0 : i32
    return %c0_i32, %c0_i32_0 : i32, i32
  }
  func.func @transform_9(%arg0: i32) -> (i32, i32) {
    %c0_i32 = arith.constant 0 : i32
    %c0_i32_0 = arith.constant 0 : i32
    %c0_i32_1 = arith.constant 0 : i32
    return %c0_i32, %c0_i32_0 : i32, i32
  }
}

</mosaic_0001>

<llo_original>
// kernel: tpu_custom_call.1
$region0: #{tpu_custom_call.1}
  #allocation0 [shape = 'u32[]', space=smem, size = 0x4, offset = 0x4, fixed_abs, tag = 'smem constant byte address 0x4 - core index']
  #allocation1 [shape = 'u32[144,128]{1,0:T(1,128)}', space=vmem, size = 0x12000, scoped, tag = 'internal scratch']
  #allocation2 [shape = 'bf16[128,256]{1,0:T(8,128)(2,1)}', space=vmem, size = 0x10000, scoped, tag = 'scratch operand']
  #allocation3 [shape = 's32[1]{0}', space=sflag, size = 0x4, scoped, tag = 'scratch operand']
  #allocation4 [shape = 'f32[64,128]{1,0:T(8,128)}', space=vmem, size = 0x8000, scoped, tag = 'scratch operand']
  #allocation5 [shape = 'f32[8,128]{1,0:T(8,128)}', space=vmem, size = 0x1000, scoped, tag = 'scratch operand']
  #allocation6 [shape = 'f32[8,128]{1,0:T(8,128)}', space=vmem, size = 0x1000, scoped, tag = 'scratch operand']
  #allocation7 [shape = 'f32[8,128]{1,0:T(8,128)}', space=vmem, size = 0x1000, scoped, tag = 'scratch operand']
  #allocation16 [shape = 's32[]', space=sflag, size = 0x4, offset = 0, fixed_abs, tag = 'sflag constant byte address 0x0 - dummy sync flag']
  #allocation17 [shape = 's32[]', space=sflag, size = 0x4, offset = 0, fixed_abs, tag = 'sflag constant byte address 0x0 - dummy sync flag']
  #allocation18 [shape = 'u32[]', space=smem, size = 0x4, offset = 0x44, fixed_abs, tag = 'smem constant byte address 0x44 - assertion arg 0']
  #allocation19 [shape = 'u32[]', space=smem, size = 0x4, offset = 0x48, fixed_abs, tag = 'smem constant byte address 0x48 - assertion arg 1']
  %s0 = inlined_call_operand.vmem [shape: f32[1,64,16], index: 0, kind: input, shape index: {}]
  %s1 = inlined_call_operand.vmem [shape: bf16[16,128], index: 1, kind: input, shape index: {}]
  %s2 = inlined_call_operand.hbm [shape: bf16[128,256], index: 2, kind: input, shape index: {}]
  %s3 = inlined_call_operand.vmem [shape: f32[2,128], index: 3, kind: input, shape index: {}]
  %s4 = inlined_call_operand.vmem [shape: f32[1,128], index: 4, kind: input, shape index: {}]
  %s5 = inlined_call_operand.hbm [shape: f32[8,8,128], index: 5, kind: output, shape index: {0}]
  %s6 = inlined_call_operand.hbm [shape: f32[8,128], index: 6, kind: output, shape index: {1}]
  %s7 = inlined_call_operand.hbm [shape: f32[8,128], index: 7, kind: output, shape index: {2}]
  %s8 = inlined_call_operand.hbm [shape: f32[8,128], index: 8, kind: output, shape index: {3}]
  %s9 = inlined_call_operand.hbm [shape: f32[1,1], index: 9, kind: output, shape index: {4}]
  %10 = xla_tuple %s5, %s6, %s7, %s8, %s9
  %s11 = sld [smem:[#allocation0]]
  $region70: #{tpu_custom_call.1} parent=0
    _
  %s13 = ssub.s32 1, %s11
  %s14 = scalar_select 0, %s13, %s11
  $region1: #{tpu_custom_call.1} parent=0
    #allocation8 [shape = 'u8[32768]{0}', space=vmem, size = 0x8000, scoped, tag = 'output window, operand 0, single buffered']
    #allocation9 [shape = 's32[1]{0}', space=sflag, size = 0x4, scoped, tag = 'scoped memory for tpu_custom_call.1']
    #allocation10 [shape = 'u8[4096]{0}', space=vmem, size = 0x1000, scoped, tag = 'output window, operand 1, single buffered']
    #allocation11 [shape = 's32[1]{0}', space=sflag, size = 0x4, scoped, tag = 'scoped memory for tpu_custom_call.1']
    #allocation12 [shape = 'u8[4096]{0}', space=vmem, size = 0x1000, scoped, tag = 'output window, operand 2, single buffered']
    #allocation13 [shape = 'u8[4096]{0}', space=vmem, size = 0x1000, scoped, tag = 'output window, operand 3, single buffered']
    #allocation14 [shape = 's32[1]{0}', space=sflag, size = 0x4, scoped, tag = 'scoped memory for tpu_custom_call.1']
    #allocation15 [shape = 'u8[512]{0}', space=vmem, size = 0x400, scoped, tag = 'output window, operand 4, single buffered']
    %15 = vsyncpa [#allocation9], 0
    %16 = vsyncpa [#allocation11], 0
    %17 = vsyncpa [#allocation14], 0
    // Predicated region
    $region2: #{tpu_custom_call.1} parent=1 // pred_check
      _
    $region3: #{tpu_custom_call.1} parent=1 // pred_check_branch
      %19 = sbr.rel (0) target = $region5
    $region4: #{tpu_custom_call.1} parent=1 // pred_region
      _
    $region5: #{tpu_custom_call.1} parent=1 // pred_fallthru
      _
    // Predicated region
    $region6: #{tpu_custom_call.1} parent=1 // pred_check
      _
    $region7: #{tpu_custom_call.1} parent=1 // pred_check_branch
      %21 = sbr.rel (0) target = $region9
    $region8: #{tpu_custom_call.1} parent=1 // pred_region
      _
    $region9: #{tpu_custom_call.1} parent=1 // pred_fallthru
      _
    // Predicated region
    $region10: #{tpu_custom_call.1} parent=1 // pred_check
      _
    $region11: #{tpu_custom_call.1} parent=1 // pred_check_branch
      %23 = sbr.rel (0) target = $region13
    $region12: #{tpu_custom_call.1} parent=1 // pred_region
      _
    $region13: #{tpu_custom_call.1} parent=1 // pred_fallthru
      _
    // Predicated region
    $region14: #{tpu_custom_call.1} parent=1 // pred_check
      _
    $region15: #{tpu_custom_call.1} parent=1 // pred_check_branch
      %25 = sbr.rel (0) target = $region17
    $region16: #{tpu_custom_call.1} parent=1 // pred_region
      _
    $region17: #{tpu_custom_call.1} parent=1 // pred_fallthru
      _
    %p27 = scmp.eq.s32.totalorder 0, 0
    // Predicated region
    $region18: #{tpu_custom_call.1} parent=1 // pred_check
      %p28 = pneg %p27
    $region19: #{tpu_custom_call.1} parent=1 // pred_check_branch
      %30 = sbr.rel (%p28) target = $region21
    $region20: #{tpu_custom_call.1} parent=1 // pred_region
      // Predicated region
      $region22: #{tpu_custom_call.1} parent=20 // pred_check
        _
      $region23: #{tpu_custom_call.1} parent=20 // pred_check_branch
        %32 = sbr.rel target = $region25
      $region24: #{tpu_custom_call.1} parent=20 // pred_region
        %33 = sst [smem:[#allocation18]] [#allocation17]
        %34 = sst [smem:[#allocation19]] [#allocation16]
      $region25: #{tpu_custom_call.1} parent=20 // pred_fallthru
        _
      %36 = shalt.err (0)
      %s38 = sshll.u32 [#allocation2], 4
      %s39 = int_to_ptr.vmem [resolvable:$true] %s38
      %41 = dma.hbm_to_vmem [thread:$0]  %s2, 2048, %s39, [#allocation3]
      %s42 = smul.u32 4, 16
      %s43 = smul.u32 %s42, 2
      %s44 = sshll.u32 %s43, 4
      %45 = dma.done [#allocation3], %s44
      %46 = vst [vmem:[#allocation10] sm:$0xff] 0.0
      %47 = vst [vmem:[#allocation12] sm:$0xff] 0.0
      %48 = vst [vmem:[#allocation13] sm:$0xff] 0.0
      %49 = vst [vmem:[#allocation5] sm:$0xff] 0.0
      %50 = vst [vmem:[#allocation6] sm:$0xff] 0.0
      %51 = vst [vmem:[#allocation7] sm:$0xff] 0.0
      %vm52 = vcmask 0
      %53 = vst.msk [vmem:[#allocation15] sm:$0x1] %vm52, 0.0
    $region21: #{tpu_custom_call.1} parent=1 // pred_fallthru
      _
    %v54 = vld [vmem:[%s0] sm:$0xff]
    %v55 = vld [vmem:[%s0 + $0x8] sm:$0xff]
    %v56 = vld [vmem:[%s0 + $0x10] sm:$0xff]
    %v57 = vld [vmem:[%s0 + $0x18] sm:$0xff]
    %v58 = vld [vmem:[%s0 + $0x20] sm:$0xff]
    %v59 = vld [vmem:[%s0 + $0x28] sm:$0xff]
    %v60 = vld [vmem:[%s0 + $0x30] sm:$0xff]
    %v61 = vld [vmem:[%s0 + $0x38] sm:$0xff]
    %v62 = vpack.c.bf16 %v55, %v54
    %v63 = vpack.c.bf16 %v57, %v56
    %v64 = vpack.c.bf16 %v59, %v58
    %v65 = vpack.c.bf16 %v61, %v60
    %v66 = vld [vmem:[%s1] sm:$0xf]
    %v67 = vld [vmem:[%s1 + $0x4] sm:$0xf]
    %v70 = vunpack.c.l.b16 %v66
    %v71 = vunpack.c.l.b16 %v67
    %v72 = vpack.c.b16 %v71, %v70
    %vm74 = vcmask 130048
    %v76 = vsel %vm74, %v62, 0
    %v79 = vsel %vm74, %v63, 0
    %v82 = vsel %vm74, %v64, 0
    %v85 = vsel %vm74, %v65, 0
    %87 = vmatprep.subr.bf16.mxu0 0
    %88 = vmatpush1.bf16.msra.mxu0 0
    %89 = vmatprep.subr.bf16.mxu0 0
    %90 = vmatpush1.bf16.msra.mxu0 0
    %91 = vmatprep.subr.bf16.mxu0 0
    %92 = vmatpush1.bf16.msra.mxu0 0
    %93 = vmatprep.subr.bf16.mxu0 0
    %94 = vmatpush1.bf16.msra.mxu0 0
    %95 = vmatprep.subr.bf16.mxu0 0
    %96 = vmatpush1.bf16.msra.mxu0 0
    %97 = vmatprep.subr.bf16.mxu0 0
    %98 = vmatpush1.bf16.msra.mxu0 0
    %99 = vmatprep.subr.bf16.mxu0 0
    %100 = vmatpush1.bf16.msra.mxu0 0
    %101 = vmatprep.subr.bf16.mxu0 0
    %102 = vmatpush1.bf16.msra.mxu0 %v72
    %103 = vmatprep.subr.bf16.mxu0 0
    %104 = vmatpush2.bf16.msra.mxu0 0
    %105 = vmatprep.subr.bf16.mxu0 0
    %106 = vmatpush2.bf16.msra.mxu0 0
    %107 = vmatprep.subr.bf16.mxu0 0
    %108 = vmatpush2.bf16.msra.mxu0 0
    %109 = vmatprep.subr.bf16.mxu0 0
    %110 = vmatpush2.bf16.msra.mxu0 0
    %111 = vmatprep.subr.bf16.mxu0 0
    %112 = vmatpush2.bf16.msra.mxu0 0
    %113 = vmatprep.subr.bf16.mxu0 0
    %114 = vmatpush2.bf16.msra.mxu0 0
    %115 = vmatprep.subr.bf16.mxu0 0
    %116 = vmatpush2.bf16.msra.mxu0 0
    %117 = vmatprep.subr.bf16.mxu0 0
    %118 = vmatpush2.bf16.msra.mxu0 0
    %119 = vmatprep.mubr.bf16.mxu0 0
    %120 = vmatmul.mubr.bf16.gmra.mxu0 %v76
    %v121 = vpop.f32.mrf.mxu0
    %v122 = vadd.f32 0.0, %v121
    %v123 = vpop.f32.mrf.mxu0
    %v124 = vpop.f32.mrf.mxu0
    %v125 = vadd.f32 0.0, %v124
    %v126 = vpop.f32.mrf.mxu0
    %127 = vmatprep.mubr.bf16.mxu0 0
    %128 = vmatmul.mubr.bf16.gmra.mxu0 %v79
    %v129 = vpop.f32.mrf.mxu0
    %v130 = vadd.f32 0.0, %v129
    %v131 = vpop.f32.mrf.mxu0
    %v132 = vpop.f32.mrf.mxu0
    %v133 = vadd.f32 0.0, %v132
    %v134 = vpop.f32.mrf.mxu0
    %135 = vmatprep.mubr.bf16.mxu0 0
    %136 = vmatmul.mubr.bf16.gmra.mxu0 %v82
    %v137 = vpop.f32.mrf.mxu0
    %v138 = vadd.f32 0.0, %v137
    %v139 = vpop.f32.mrf.mxu0
    %v140 = vpop.f32.mrf.mxu0
    %v141 = vadd.f32 0.0, %v140
    %v142 = vpop.f32.mrf.mxu0
    %143 = vmatprep.mubr.bf16.mxu0 0
    %144 = vmatmul.mubr.bf16.gmra.mxu0 %v85
    %v145 = vpop.f32.mrf.mxu0
    %v146 = vadd.f32 0.0, %v145
    %v147 = vpop.f32.mrf.mxu0
    %v148 = vpop.f32.mrf.mxu0
    %v149 = vadd.f32 0.0, %v148
    %v150 = vpop.f32.mrf.mxu0
    %151 = vdwg.mxu0
    %152 = vst [vmem:[#allocation4] sm:$0xff] %v122
    %153 = vst [vmem:[#allocation4 + $0x8] sm:$0xff] %v125
    %154 = vst [vmem:[#allocation4 + $0x10] sm:$0xff] %v130
    %155 = vst [vmem:[#allocation4 + $0x18] sm:$0xff] %v133
    %156 = vst [vmem:[#allocation4 + $0x20] sm:$0xff] %v138
    %157 = vst [vmem:[#allocation4 + $0x28] sm:$0xff] %v141
    %158 = vst [vmem:[#allocation4 + $0x30] sm:$0xff] %v146
    %159 = vst [vmem:[#allocation4 + $0x38] sm:$0xff] %v149
    %v160 = vld [vmem:[#allocation2] sm:$0xff]
    %v161 = vld [vmem:[#allocation2 + $0x8] sm:$0xff]
    %v162 = vld [vmem:[#allocation2 + $0x10] sm:$0xff]
    %v163 = vld [vmem:[#allocation2 + $0x18] sm:$0xff]
    %v164 = vld [vmem:[#allocation2 + $0x20] sm:$0xff]
    %v165 = vld [vmem:[#allocation2 + $0x28] sm:$0xff]
    %v166 = vld [vmem:[#allocation2 + $0x30] sm:$0xff]
    %v167 = vld [vmem:[#allocation2 + $0x38] sm:$0xff]
    %v168 = vld [vmem:[#allocation2 + $0x40] sm:$0xff]
    %v169 = vld [vmem:[#allocation2 + $0x48] sm:$0xff]
    %v170 = vld [vmem:[#allocation2 + $0x50] sm:$0xff]
    %v171 = vld [vmem:[#allocation2 + $0x58] sm:$0xff]
    %v172 = vld [vmem:[#allocation2 + $0x60] sm:$0xff]
    %v173 = vld [vmem:[#allocation2 + $0x68] sm:$0xff]
    %v174 = vld [vmem:[#allocation2 + $0x70] sm:$0xff]
    %v175 = vld [vmem:[#allocation2 + $0x78] sm:$0xff]
    %v176 = vld [vmem:[%s3] sm:$0x1]
    %v177 = vld [vmem:[%s3 + $0x1] sm:$0x1]
    %v178 = vld [vmem:[%s4] sm:$0x1]
    %v179 = vld [vmem:[#allocation12] sm:$0xff]
    %v180 = vld [vmem:[#allocation5] sm:$0xff]
    %v181 = vld [vmem:[#allocation13] sm:$0xff]
    %v182 = vld [vmem:[#allocation6] sm:$0xff]
    %v183 = vld [vmem:[#allocation7] sm:$0xff]
    %v184 = vld [vmem:[#allocation4] sm:$0xff]
    %v185 = vlaneseq
    %v186 = vshrl.u32 %v185, 7
    %v187 = vsub.s32 0, %v186
    %v188 = vrot.slane %v176, %v187
    %v189 = vmul.f32 %v188, %v179
    %v190 = vlaneseq
    %v191 = vshrl.u32 %v190, 7
    %v192 = vsub.s32 0, %v191
    %v193 = vrot.slane %v177, %v192
    %v194 = vmul.f32 %v193, %v180
    %v195 = vsub.f32 %v189, %v194
    %v196 = vadd.f32 %v184, %v182
    %v197 = vadd.f32 %v195, %v196
    %v198 = vmul.f32 %v188, %v180
    %v199 = vmul.f32 %v193, %v179
    %v200 = vadd.f32 %v198, %v199
    %v201 = vsub.f32 %v197, 1.0
    %vm202 = vcmp.gt.f32.partialorder %v201, 0.0
    %v203 = vsel %vm202, 1, 0
    %v204 = vcvt.s32.f32 %v203
    %v205 = vpack.c.bf16 %v204, %v204
    %v206 = vadd.f32 %v183, %v204
    %v223 = vunpack.c.l.b16 %v160
    %v224 = vunpack.c.h.b16 %v160
    %v225 = vunpack.c.l.b16 %v161
    %v226 = vunpack.c.h.b16 %v161
    %v227 = vunpack.c.l.b16 %v162
    %v228 = vunpack.c.h.b16 %v162
    %v229 = vunpack.c.l.b16 %v163
    %v230 = vunpack.c.h.b16 %v163
    %v231 = vunpack.c.l.b16 %v164
    %v232 = vunpack.c.h.b16 %v164
    %v233 = vunpack.c.l.b16 %v165
    %v234 = vunpack.c.h.b16 %v165
    %v235 = vunpack.c.l.b16 %v166
    %v236 = vunpack.c.h.b16 %v166
    %v237 = vunpack.c.l.b16 %v167
    %v238 = vunpack.c.h.b16 %v167
    %v239 = vunpack.c.l.b16 %v168
    %v240 = vunpack.c.h.b16 %v168
    %v241 = vunpack.c.l.b16 %v169
    %v242 = vunpack.c.h.b16 %v169
    %v243 = vunpack.c.l.b16 %v170
    %v244 = vunpack.c.h.b16 %v170
    %v245 = vunpack.c.l.b16 %v171
    %v246 = vunpack.c.h.b16 %v171
    %v247 = vunpack.c.l.b16 %v172
    %v248 = vunpack.c.h.b16 %v172
    %v249 = vunpack.c.l.b16 %v173
    %v250 = vunpack.c.h.b16 %v173
    %v251 = vunpack.c.l.b16 %v174
    %v252 = vunpack.c.h.b16 %v174
    %v253 = vunpack.c.l.b16 %v175
    %v254 = vunpack.c.h.b16 %v175
    %v255 = vpack.c.b16 %v225, %v223
    %v256 = vpack.c.b16 %v226, %v224
    %v257 = vpack.c.b16 %v229, %v227
    %v258 = vpack.c.b16 %v230, %v228
    %v259 = vpack.c.b16 %v233, %v231
    %v260 = vpack.c.b16 %v234, %v232
    %v261 = vpack.c.b16 %v237, %v235
    %v262 = vpack.c.b16 %v238, %v236
    %v263 = vpack.c.b16 %v241, %v239
    %v264 = vpack.c.b16 %v242, %v240
    %v265 = vpack.c.b16 %v245, %v243
    %v266 = vpack.c.b16 %v246, %v244
    %v267 = vpack.c.b16 %v249, %v247
    %v268 = vpack.c.b16 %v250, %v248
    %v269 = vpack.c.b16 %v253, %v251
    %v270 = vpack.c.b16 %v254, %v252
    %287 = vmatprep.subr.bf16.mxu0 %v270
    %288 = vmatpush1.bf16.msra.mxu0 %v269
    %289 = vmatprep.subr.bf16.mxu0 %v268
    %290 = vmatpush1.bf16.msra.mxu0 %v267
    %291 = vmatprep.subr.bf16.mxu0 %v266
    %292 = vmatpush1.bf16.msra.mxu0 %v265
    %293 = vmatprep.subr.bf16.mxu0 %v264
    %294 = vmatpush1.bf16.msra.mxu0 %v263
    %295 = vmatprep.subr.bf16.mxu0 %v262
    %296 = vmatpush1.bf16.msra.mxu0 %v261
    %297 = vmatprep.subr.bf16.mxu0 %v260
    %298 = vmatpush1.bf16.msra.mxu0 %v259
    %299 = vmatprep.subr.bf16.mxu0 %v258
    %300 = vmatpush1.bf16.msra.mxu0 %v257
    %301 = vmatprep.subr.bf16.mxu0 %v256
    %302 = vmatpush1.bf16.msra.mxu0 %v255
    %303 = vmatprep.subr.bf16.mxu0 0
    %304 = vmatpush2.bf16.msra.mxu0 0
    %305 = vmatprep.subr.bf16.mxu0 0
    %306 = vmatpush2.bf16.msra.mxu0 0
    %307 = vmatprep.subr.bf16.mxu0 0
    %308 = vmatpush2.bf16.msra.mxu0 0
    %309 = vmatprep.subr.bf16.mxu0 0
    %310 = vmatpush2.bf16.msra.mxu0 0
    %311 = vmatprep.subr.bf16.mxu0 0
    %312 = vmatpush2.bf16.msra.mxu0 0
    %313 = vmatprep.subr.bf16.mxu0 0
    %314 = vmatpush2.bf16.msra.mxu0 0
    %315 = vmatprep.subr.bf16.mxu0 0
    %316 = vmatpush2.bf16.msra.mxu0 0
    %317 = vmatprep.subr.bf16.mxu0 0
    %318 = vmatpush2.bf16.msra.mxu0 0
    %319 = vmatprep.mubr.bf16.mxu0 0
    %320 = vmatmul.mubr.bf16.gmra.mxu0 %v205
    %v321 = vpop.f32.mrf.mxu0
    %v322 = vadd.f32 0.0, %v321
    %v323 = vpop.f32.mrf.mxu0
    %v324 = vadd.f32 0.0, %v323
    %v325 = vpop.f32.mrf.mxu0
    %v326 = vpop.f32.mrf.mxu0
    %327 = vdwg.mxu0
    %v329 = vlaneseq
    %v330 = vshrl.u32 %v329, 7
    %v331 = vsub.s32 0, %v330
    %v332 = vrot.slane %v178, %v331
    %v334 = vmul.f32 %v332, %v181
    %v335 = vadd.f32 %v334, %v324
    %v336 = vmul.f32 %v335, 4096.0
    %v337 = vround.ne.pseudo %v336
    %v338 = vmul.f32 %v337, 0.00024414063
    %339 = vst [vmem:[#allocation8] sm:$0xff] %v338
    %s340 = scalar_lea.vmem [#allocation4], 8
    %v341 = vld [vmem:[%s340] sm:$0xff]
    %v342 = vmul.f32 %v188, %v197
    %v343 = vmul.f32 %v193, %v200
    %v344 = vsub.f32 %v342, %v343
    %v345 = vadd.f32 %v341, %v322
    %v346 = vadd.f32 %v344, %v345
    %v347 = vmul.f32 %v188, %v200
    %v348 = vmul.f32 %v193, %v197
    %v349 = vadd.f32 %v347, %v348
    %v350 = vsub.f32 %v346, 1.0
    %vm351 = vcmp.gt.f32.partialorder %v350, 0.0
    %v352 = vsel %vm351, 1, 0
    %v353 = vcvt.s32.f32 %v352
    %v354 = vpack.c.bf16 %v353, %v353
    %v355 = vadd.f32 %v206, %v353
    %356 = vmatprep.subr.bf16.mxu0 %v270
    %357 = vmatpush1.bf16.msra.mxu0 %v269
    %358 = vmatprep.subr.bf16.mxu0 %v268
    %359 = vmatpush1.bf16.msra.mxu0 %v267
    %360 = vmatprep.subr.bf16.mxu0 %v266
    %361 = vmatpush1.bf16.msra.mxu0 %v265
    %362 = vmatprep.subr.bf16.mxu0 %v264
    %363 = vmatpush1.bf16.msra.mxu0 %v263
    %364 = vmatprep.subr.bf16.mxu0 %v262
    %365 = vmatpush1.bf16.msra.mxu0 %v261
    %366 = vmatprep.subr.bf16.mxu0 %v260
    %367 = vmatpush1.bf16.msra.mxu0 %v259
    %368 = vmatprep.subr.bf16.mxu0 %v258
    %369 = vmatpush1.bf16.msra.mxu0 %v257
    %370 = vmatprep.subr.bf16.mxu0 %v256
    %371 = vmatpush1.bf16.msra.mxu0 %v255
    %372 = vmatprep.subr.bf16.mxu0 0
    %373 = vmatpush2.bf16.msra.mxu0 0
    %374 = vmatprep.subr.bf16.mxu0 0
    %375 = vmatpush2.bf16.msra.mxu0 0
    %376 = vmatprep.subr.bf16.mxu0 0
    %377 = vmatpush2.bf16.msra.mxu0 0
    %378 = vmatprep.subr.bf16.mxu0 0
    %379 = vmatpush2.bf16.msra.mxu0 0
    %380 = vmatprep.subr.bf16.mxu0 0
    %381 = vmatpush2.bf16.msra.mxu0 0
    %382 = vmatprep.subr.bf16.mxu0 0
    %383 = vmatpush2.bf16.msra.mxu0 0
    %384 = vmatprep.subr.bf16.mxu0 0
    %385 = vmatpush2.bf16.msra.mxu0 0
    %386 = vmatprep.subr.bf16.mxu0 0
    %387 = vmatpush2.bf16.msra.mxu0 0
    %388 = vmatprep.mubr.bf16.mxu0 0
    %389 = vmatmul.mubr.bf16.gmra.mxu0 %v354
    %v390 = vpop.f32.mrf.mxu0
    %v391 = vadd.f32 0.0, %v390
    %v392 = vpop.f32.mrf.mxu0
    %v393 = vadd.f32 0.0, %v392
    %v394 = vpop.f32.mrf.mxu0
    %v395 = vpop.f32.mrf.mxu0
    %396 = vdwg.mxu0
    %v397 = vmul.f32 %v332, %v338
    %v398 = vadd.f32 %v397, %v393
    %v399 = vmul.f32 %v398, 4096.0
    %v400 = vround.ne.pseudo %v399
    %v401 = vmul.f32 %v400, 0.00024414063
    %s402 = scalar_lea.vmem [#allocation8], 8
    %403 = vst [vmem:[%s402] sm:$0xff] %v401
    %s404 = scalar_lea.vmem [#allocation4], 16
    %v405 = vld [vmem:[%s404] sm:$0xff]
    %v406 = vmul.f32 %v188, %v346
    %v407 = vmul.f32 %v193, %v349
    %v408 = vsub.f32 %v406, %v407
    %v409 = vadd.f32 %v405, %v391
    %v410 = vadd.f32 %v408, %v409
    %v411 = vmul.f32 %v188, %v349
    %v412 = vmul.f32 %v193, %v346
    %v413 = vadd.f32 %v411, %v412
    %v414 = vsub.f32 %v410, 1.0
    %vm415 = vcmp.gt.f32.partialorder %v414, 0.0
    %v416 = vsel %vm415, 1, 0
    %v417 = vcvt.s32.f32 %v416
    %v418 = vpack.c.bf16 %v417, %v417
    %v419 = vadd.f32 %v355, %v417
    %420 = vmatprep.subr.bf16.mxu0 %v270
    %421 = vmatpush1.bf16.msra.mxu0 %v269
    %422 = vmatprep.subr.bf16.mxu0 %v268
    %423 = vmatpush1.bf16.msra.mxu0 %v267
    %424 = vmatprep.subr.bf16.mxu0 %v266
    %425 = vmatpush1.bf16.msra.mxu0 %v265
    %426 = vmatprep.subr.bf16.mxu0 %v264
    %427 = vmatpush1.bf16.msra.mxu0 %v263
    %428 = vmatprep.subr.bf16.mxu0 %v262
    %429 = vmatpush1.bf16.msra.mxu0 %v261
    %430 = vmatprep.subr.bf16.mxu0 %v260
    %431 = vmatpush1.bf16.msra.mxu0 %v259
    %432 = vmatprep.subr.bf16.mxu0 %v258
    %433 = vmatpush1.bf16.msra.mxu0 %v257
    %434 = vmatprep.subr.bf16.mxu0 %v256
    %435 = vmatpush1.bf16.msra.mxu0 %v255
    %436 = vmatprep.subr.bf16.mxu0 0
    %437 = vmatpush2.bf16.msra.mxu0 0
    %438 = vmatprep.subr.bf16.mxu0 0
    %439 = vmatpush2.bf16.msra.mxu0 0
    %440 = vmatprep.subr.bf16.mxu0 0
    %441 = vmatpush2.bf16.msra.mxu0 0
    %442 = vmatprep.subr.bf16.mxu0 0
    %443 = vmatpush2.bf16.msra.mxu0 0
    %444 = vmatprep.subr.bf16.mxu0 0
    %445 = vmatpush2.bf16.msra.mxu0 0
    %446 = vmatprep.subr.bf16.mxu0 0
    %447 = vmatpush2.bf16.msra.mxu0 0
    %448 = vmatprep.subr.bf16.mxu0 0
    %449 = vmatpush2.bf16.msra.mxu0 0
    %450 = vmatprep.subr.bf16.mxu0 0
    %451 = vmatpush2.bf16.msra.mxu0 0
    %452 = vmatprep.mubr.bf16.mxu0 0
    %453 = vmatmul.mubr.bf16.gmra.mxu0 %v418
    %v454 = vpop.f32.mrf.mxu0
    %v455 = vadd.f32 0.0, %v454
    %v456 = vpop.f32.mrf.mxu0
    %v457 = vadd.f32 0.0, %v456
    %v458 = vpop.f32.mrf.mxu0
    %v459 = vpop.f32.mrf.mxu0
    %460 = vdwg.mxu0
    %v461 = vmul.f32 %v332, %v401
    %v462 = vadd.f32 %v461, %v457
    %v463 = vmul.f32 %v462, 4096.0
    %v464 = vround.ne.pseudo %v463
    %v465 = vmul.f32 %v464, 0.00024414063
    %s466 = scalar_lea.vmem [#allocation8], 16
    %467 = vst [vmem:[%s466] sm:$0xff] %v465
    %s468 = scalar_lea.vmem [#allocation4], 24
    %v469 = vld [vmem:[%s468] sm:$0xff]
    %v470 = vmul.f32 %v188, %v410
    %v471 = vmul.f32 %v193, %v413
    %v472 = vsub.f32 %v470, %v471
    %v473 = vadd.f32 %v469, %v455
    %v474 = vadd.f32 %v472, %v473
    %v475 = vmul.f32 %v188, %v413
    %v476 = vmul.f32 %v193, %v410
    %v477 = vadd.f32 %v475, %v476
    %v478 = vsub.f32 %v474, 1.0
    %vm479 = vcmp.gt.f32.partialorder %v478, 0.0
    %v480 = vsel %vm479, 1, 0
    %v481 = vcvt.s32.f32 %v480
    %v482 = vpack.c.bf16 %v481, %v481
    %v483 = vadd.f32 %v419, %v481
    %484 = vmatprep.subr.bf16.mxu0 %v270
    %485 = vmatpush1.bf16.msra.mxu0 %v269
    %486 = vmatprep.subr.bf16.mxu0 %v268
    %487 = vmatpush1.bf16.msra.mxu0 %v267
    %488 = vmatprep.subr.bf16.mxu0 %v266
    %489 = vmatpush1.bf16.msra.mxu0 %v265
    %490 = vmatprep.subr.bf16.mxu0 %v264
    %491 = vmatpush1.bf16.msra.mxu0 %v263
    %492 = vmatprep.subr.bf16.mxu0 %v262
    %493 = vmatpush1.bf16.msra.mxu0 %v261
    %494 = vmatprep.subr.bf16.mxu0 %v260
    %495 = vmatpush1.bf16.msra.mxu0 %v259
    %496 = vmatprep.subr.bf16.mxu0 %v258
    %497 = vmatpush1.bf16.msra.mxu0 %v257
    %498 = vmatprep.subr.bf16.mxu0 %v256
    %499 = vmatpush1.bf16.msra.mxu0 %v255
    %500 = vmatprep.subr.bf16.mxu0 0
    %501 = vmatpush2.bf16.msra.mxu0 0
    %502 = vmatprep.subr.bf16.mxu0 0
    %503 = vmatpush2.bf16.msra.mxu0 0
    %504 = vmatprep.subr.bf16.mxu0 0
    %505 = vmatpush2.bf16.msra.mxu0 0
    %506 = vmatprep.subr.bf16.mxu0 0
    %507 = vmatpush2.bf16.msra.mxu0 0
    %508 = vmatprep.subr.bf16.mxu0 0
    %509 = vmatpush2.bf16.msra.mxu0 0
    %510 = vmatprep.subr.bf16.mxu0 0
    %511 = vmatpush2.bf16.msra.mxu0 0
    %512 = vmatprep.subr.bf16.mxu0 0
    %513 = vmatpush2.bf16.msra.mxu0 0
    %514 = vmatprep.subr.bf16.mxu0 0
    %515 = vmatpush2.bf16.msra.mxu0 0
    %516 = vmatprep.mubr.bf16.mxu0 0
    %517 = vmatmul.mubr.bf16.gmra.mxu0 %v482
    %v518 = vpop.f32.mrf.mxu0
    %v519 = vadd.f32 0.0, %v518
    %v520 = vpop.f32.mrf.mxu0
    %v521 = vadd.f32 0.0, %v520
    %v522 = vpop.f32.mrf.mxu0
    %v523 = vpop.f32.mrf.mxu0
    %524 = vdwg.mxu0
    %v525 = vmul.f32 %v332, %v465
    %v526 = vadd.f32 %v525, %v521
    %v527 = vmul.f32 %v526, 4096.0
    %v528 = vround.ne.pseudo %v527
    %v529 = vmul.f32 %v528, 0.00024414063
    %s530 = scalar_lea.vmem [#allocation8], 24
    %531 = vst [vmem:[%s530] sm:$0xff] %v529
    %s532 = scalar_lea.vmem [#allocation4], 32
    %v533 = vld [vmem:[%s532] sm:$0xff]
    %v534 = vmul.f32 %v188, %v474
    %v535 = vmul.f32 %v193, %v477
    %v536 = vsub.f32 %v534, %v535
    %v537 = vadd.f32 %v533, %v519
    %v538 = vadd.f32 %v536, %v537
    %v539 = vmul.f32 %v188, %v477
    %v540 = vmul.f32 %v193, %v474
    %v541 = vadd.f32 %v539, %v540
    %v542 = vsub.f32 %v538, 1.0
    %vm543 = vcmp.gt.f32.partialorder %v542, 0.0
    %v544 = vsel %vm543, 1, 0
    %v545 = vcvt.s32.f32 %v544
    %v546 = vpack.c.bf16 %v545, %v545
    %v547 = vadd.f32 %v483, %v545
    %548 = vmatprep.subr.bf16.mxu0 %v270
    %549 = vmatpush1.bf16.msra.mxu0 %v269
    %550 = vmatprep.subr.bf16.mxu0 %v268
    %551 = vmatpush1.bf16.msra.mxu0 %v267
    %552 = vmatprep.subr.bf16.mxu0 %v266
    %553 = vmatpush1.bf16.msra.mxu0 %v265
    %554 = vmatprep.subr.bf16.mxu0 %v264
    %555 = vmatpush1.bf16.msra.mxu0 %v263
    %556 = vmatprep.subr.bf16.mxu0 %v262
    %557 = vmatpush1.bf16.msra.mxu0 %v261
    %558 = vmatprep.subr.bf16.mxu0 %v260
    %559 = vmatpush1.bf16.msra.mxu0 %v259
    %560 = vmatprep.subr.bf16.mxu0 %v258
    %561 = vmatpush1.bf16.msra.mxu0 %v257
    %562 = vmatprep.subr.bf16.mxu0 %v256
    %563 = vmatpush1.bf16.msra.mxu0 %v255
    %564 = vmatprep.subr.bf16.mxu0 0
    %565 = vmatpush2.bf16.msra.mxu0 0
    %566 = vmatprep.subr.bf16.mxu0 0
    %567 = vmatpush2.bf16.msra.mxu0 0
    %568 = vmatprep.subr.bf16.mxu0 0
    %569 = vmatpush2.bf16.msra.mxu0 0
    %570 = vmatprep.subr.bf16.mxu0 0
    %571 = vmatpush2.bf16.msra.mxu0 0
    %572 = vmatprep.subr.bf16.mxu0 0
    %573 = vmatpush2.bf16.msra.mxu0 0
    %574 = vmatprep.subr.bf16.mxu0 0
    %575 = vmatpush2.bf16.msra.mxu0 0
    %576 = vmatprep.subr.bf16.mxu0 0
    %577 = vmatpush2.bf16.msra.mxu0 0
    %578 = vmatprep.subr.bf16.mxu0 0
    %579 = vmatpush2.bf16.msra.mxu0 0
    %580 = vmatprep.mubr.bf16.mxu0 0
    %581 = vmatmul.mubr.bf16.gmra.mxu0 %v546
    %v582 = vpop.f32.mrf.mxu0
    %v583 = vadd.f32 0.0, %v582
    %v584 = vpop.f32.mrf.mxu0
    %v585 = vadd.f32 0.0, %v584
    %v586 = vpop.f32.mrf.mxu0
    %v587 = vpop.f32.mrf.mxu0
    %588 = vdwg.mxu0
    %v589 = vmul.f32 %v332, %v529
    %v590 = vadd.f32 %v589, %v585
    %v591 = vmul.f32 %v590, 4096.0
    %v592 = vround.ne.pseudo %v591
    %v593 = vmul.f32 %v592, 0.00024414063
    %s594 = scalar_lea.vmem [#allocation8], 32
    %595 = vst [vmem:[%s594] sm:$0xff] %v593
    %s596 = scalar_lea.vmem [#allocation4], 40
    %v597 = vld [vmem:[%s596] sm:$0xff]
    %v598 = vmul.f32 %v188, %v538
    %v599 = vmul.f32 %v193, %v541
    %v600 = vsub.f32 %v598, %v599
    %v601 = vadd.f32 %v597, %v583
    %v602 = vadd.f32 %v600, %v601
    %v603 = vmul.f32 %v188, %v541
    %v604 = vmul.f32 %v193, %v538
    %v605 = vadd.f32 %v603, %v604
    %v606 = vsub.f32 %v602, 1.0
    %vm607 = vcmp.gt.f32.partialorder %v606, 0.0
    %v608 = vsel %vm607, 1, 0
    %v609 = vcvt.s32.f32 %v608
    %v610 = vpack.c.bf16 %v609, %v609
    %v611 = vadd.f32 %v547, %v609
    %612 = vmatprep.subr.bf16.mxu0 %v270
    %613 = vmatpush1.bf16.msra.mxu0 %v269
    %614 = vmatprep.subr.bf16.mxu0 %v268
    %615 = vmatpush1.bf16.msra.mxu0 %v267
    %616 = vmatprep.subr.bf16.mxu0 %v266
    %617 = vmatpush1.bf16.msra.mxu0 %v265
    %618 = vmatprep.subr.bf16.mxu0 %v264
    %619 = vmatpush1.bf16.msra.mxu0 %v263
    %620 = vmatprep.subr.bf16.mxu0 %v262
    %621 = vmatpush1.bf16.msra.mxu0 %v261
    %622 = vmatprep.subr.bf16.mxu0 %v260
    %623 = vmatpush1.bf16.msra.mxu0 %v259
    %624 = vmatprep.subr.bf16.mxu0 %v258
    %625 = vmatpush1.bf16.msra.mxu0 %v257
    %626 = vmatprep.subr.bf16.mxu0 %v256
    %627 = vmatpush1.bf16.msra.mxu0 %v255
    %628 = vmatprep.subr.bf16.mxu0 0
    %629 = vmatpush2.bf16.msra.mxu0 0
    %630 = vmatprep.subr.bf16.mxu0 0
    %631 = vmatpush2.bf16.msra.mxu0 0
    %632 = vmatprep.subr.bf16.mxu0 0
    %633 = vmatpush2.bf16.msra.mxu0 0
    %634 = vmatprep.subr.bf16.mxu0 0
    %635 = vmatpush2.bf16.msra.mxu0 0
    %636 = vmatprep.subr.bf16.mxu0 0
    %637 = vmatpush2.bf16.msra.mxu0 0
    %638 = vmatprep.subr.bf16.mxu0 0
    %639 = vmatpush2.bf16.msra.mxu0 0
    %640 = vmatprep.subr.bf16.mxu0 0
    %641 = vmatpush2.bf16.msra.mxu0 0
    %642 = vmatprep.subr.bf16.mxu0 0
    %643 = vmatpush2.bf16.msra.mxu0 0
    %644 = vmatprep.mubr.bf16.mxu0 0
    %645 = vmatmul.mubr.bf16.gmra.mxu0 %v610
    %v646 = vpop.f32.mrf.mxu0
    %v647 = vadd.f32 0.0, %v646
    %v648 = vpop.f32.mrf.mxu0
    %v649 = vadd.f32 0.0, %v648
    %v650 = vpop.f32.mrf.mxu0
    %v651 = vpop.f32.mrf.mxu0
    %652 = vdwg.mxu0
    %v653 = vmul.f32 %v332, %v593
    %v654 = vadd.f32 %v653, %v649
    %v655 = vmul.f32 %v654, 4096.0
    %v656 = vround.ne.pseudo %v655
    %v657 = vmul.f32 %v656, 0.00024414063
    %s658 = scalar_lea.vmem [#allocation8], 40
    %659 = vst [vmem:[%s658] sm:$0xff] %v657
    %s660 = scalar_lea.vmem [#allocation4], 48
    %v661 = vld [vmem:[%s660] sm:$0xff]
    %v662 = vmul.f32 %v188, %v602
    %v663 = vmul.f32 %v193, %v605
    %v664 = vsub.f32 %v662, %v663
    %v665 = vadd.f32 %v661, %v647
    %v666 = vadd.f32 %v664, %v665
    %v667 = vmul.f32 %v188, %v605
    %v668 = vmul.f32 %v193, %v602
    %v669 = vadd.f32 %v667, %v668
    %v670 = vsub.f32 %v666, 1.0
    %vm671 = vcmp.gt.f32.partialorder %v670, 0.0
    %v672 = vsel %vm671, 1, 0
    %v673 = vcvt.s32.f32 %v672
    %v674 = vpack.c.bf16 %v673, %v673
    %v675 = vadd.f32 %v611, %v673
    %676 = vmatprep.subr.bf16.mxu0 %v270
    %677 = vmatpush1.bf16.msra.mxu0 %v269
    %678 = vmatprep.subr.bf16.mxu0 %v268
    %679 = vmatpush1.bf16.msra.mxu0 %v267
    %680 = vmatprep.subr.bf16.mxu0 %v266
    %681 = vmatpush1.bf16.msra.mxu0 %v265
    %682 = vmatprep.subr.bf16.mxu0 %v264
    %683 = vmatpush1.bf16.msra.mxu0 %v263
    %684 = vmatprep.subr.bf16.mxu0 %v262
    %685 = vmatpush1.bf16.msra.mxu0 %v261
    %686 = vmatprep.subr.bf16.mxu0 %v260
    %687 = vmatpush1.bf16.msra.mxu0 %v259
    %688 = vmatprep.subr.bf16.mxu0 %v258
    %689 = vmatpush1.bf16.msra.mxu0 %v257
    %690 = vmatprep.subr.bf16.mxu0 %v256
    %691 = vmatpush1.bf16.msra.mxu0 %v255
    %692 = vmatprep.subr.bf16.mxu0 0
    %693 = vmatpush2.bf16.msra.mxu0 0
    %694 = vmatprep.subr.bf16.mxu0 0
    %695 = vmatpush2.bf16.msra.mxu0 0
    %696 = vmatprep.subr.bf16.mxu0 0
    %697 = vmatpush2.bf16.msra.mxu0 0
    %698 = vmatprep.subr.bf16.mxu0 0
    %699 = vmatpush2.bf16.msra.mxu0 0
    %700 = vmatprep.subr.bf16.mxu0 0
    %701 = vmatpush2.bf16.msra.mxu0 0
    %702 = vmatprep.subr.bf16.mxu0 0
    %703 = vmatpush2.bf16.msra.mxu0 0
    %704 = vmatprep.subr.bf16.mxu0 0
    %705 = vmatpush2.bf16.msra.mxu0 0
    %706 = vmatprep.subr.bf16.mxu0 0
    %707 = vmatpush2.bf16.msra.mxu0 0
    %708 = vmatprep.mubr.bf16.mxu0 0
    %709 = vmatmul.mubr.bf16.gmra.mxu0 %v674
    %v710 = vpop.f32.mrf.mxu0
    %v711 = vadd.f32 0.0, %v710
    %v712 = vpop.f32.mrf.mxu0
    %v713 = vadd.f32 0.0, %v712
    %v714 = vpop.f32.mrf.mxu0
    %v715 = vpop.f32.mrf.mxu0
    %716 = vdwg.mxu0
    %v717 = vmul.f32 %v332, %v657
    %v718 = vadd.f32 %v717, %v713
    %v719 = vmul.f32 %v718, 4096.0
    %v720 = vround.ne.pseudo %v719
    %v721 = vmul.f32 %v720, 0.00024414063
    %s722 = scalar_lea.vmem [#allocation8], 48
    %723 = vst [vmem:[%s722] sm:$0xff] %v721
    %s724 = scalar_lea.vmem [#allocation4], 56
    %v725 = vld [vmem:[%s724] sm:$0xff]
    %v726 = vmul.f32 %v188, %v666
    %v727 = vmul.f32 %v193, %v669
    %v728 = vsub.f32 %v726, %v727
    %v729 = vadd.f32 %v725, %v711
    %v730 = vadd.f32 %v728, %v729
    %v731 = vmul.f32 %v188, %v669
    %v732 = vmul.f32 %v193, %v666
    %v733 = vadd.f32 %v731, %v732
    %v734 = vsub.f32 %v730, 1.0
    %vm735 = vcmp.gt.f32.partialorder %v734, 0.0
    %v736 = vsel %vm735, 1, 0
    %v737 = vcvt.s32.f32 %v736
    %v738 = vpack.c.bf16 %v737, %v737
    %v739 = vadd.f32 %v675, %v737
    %740 = vmatprep.subr.bf16.mxu0 %v270
    %741 = vmatpush1.bf16.msra.mxu0 %v269
    %742 = vmatprep.subr.bf16.mxu0 %v268
    %743 = vmatpush1.bf16.msra.mxu0 %v267
    %744 = vmatprep.subr.bf16.mxu0 %v266
    %745 = vmatpush1.bf16.msra.mxu0 %v265
    %746 = vmatprep.subr.bf16.mxu0 %v264
    %747 = vmatpush1.bf16.msra.mxu0 %v263
    %748 = vmatprep.subr.bf16.mxu0 %v262
    %749 = vmatpush1.bf16.msra.mxu0 %v261
    %750 = vmatprep.subr.bf16.mxu0 %v260
    %751 = vmatpush1.bf16.msra.mxu0 %v259
    %752 = vmatprep.subr.bf16.mxu0 %v258
    %753 = vmatpush1.bf16.msra.mxu0 %v257
    %754 = vmatprep.subr.bf16.mxu0 %v256
    %755 = vmatpush1.bf16.msra.mxu0 %v255
    %756 = vmatprep.subr.bf16.mxu0 0
    %757 = vmatpush2.bf16.msra.mxu0 0
    %758 = vmatprep.subr.bf16.mxu0 0
    %759 = vmatpush2.bf16.msra.mxu0 0
    %760 = vmatprep.subr.bf16.mxu0 0
    %761 = vmatpush2.bf16.msra.mxu0 0
    %762 = vmatprep.subr.bf16.mxu0 0
    %763 = vmatpush2.bf16.msra.mxu0 0
    %764 = vmatprep.subr.bf16.mxu0 0
    %765 = vmatpush2.bf16.msra.mxu0 0
    %766 = vmatprep.subr.bf16.mxu0 0
    %767 = vmatpush2.bf16.msra.mxu0 0
    %768 = vmatprep.subr.bf16.mxu0 0
    %769 = vmatpush2.bf16.msra.mxu0 0
    %770 = vmatprep.subr.bf16.mxu0 0
    %771 = vmatpush2.bf16.msra.mxu0 0
    %772 = vmatprep.mubr.bf16.mxu0 0
    %773 = vmatmul.mubr.bf16.gmra.mxu0 %v738
    %v774 = vpop.f32.mrf.mxu0
    %v775 = vadd.f32 0.0, %v774
    %v776 = vpop.f32.mrf.mxu0
    %v777 = vadd.f32 0.0, %v776
    %v778 = vpop.f32.mrf.mxu0
    %v779 = vpop.f32.mrf.mxu0
    %780 = vdwg.mxu0
    %v781 = vmul.f32 %v332, %v721
    %v782 = vadd.f32 %v781, %v777
    %v783 = vmul.f32 %v782, 4096.0
    %v784 = vround.ne.pseudo %v783
    %v785 = vmul.f32 %v784, 0.00024414063
    %s786 = scalar_lea.vmem [#allocation8], 56
    %787 = vst [vmem:[%s786] sm:$0xff] %v785
    %v788 = vunpack.c.l.bf16 %v738
    %789 = vst [vmem:[#allocation10] sm:$0xff] %v788
    %790 = vst [vmem:[#allocation12] sm:$0xff] %v730
    %791 = vst [vmem:[#allocation13] sm:$0xff] %v785
    %792 = vst [vmem:[#allocation5] sm:$0xff] %v733
    %793 = vst [vmem:[#allocation6] sm:$0xff] %v775
    %794 = vst [vmem:[#allocation7] sm:$0xff] %v739
    // Predicated region
    $region26: #{tpu_custom_call.1} parent=1 // pred_check
      %p795 = pneg %p27
    $region27: #{tpu_custom_call.1} parent=1 // pred_check_branch
      %797 = sbr.rel (%p795) target = $region29
    $region28: #{tpu_custom_call.1} parent=1 // pred_region
      %798 = vadd.xlane.f32.xlu0 %v739
      %v799 = vpop.xlane.xlu0 %798
      %v800 = vrot.slane %v799, 4
      %v801 = vadd.f32 %v799, %v800
      %v802 = vrot.slane %v801, 2
      %v803 = vadd.f32 %v801, %v802
      %v804 = vrot.slane %v803, 1
      %v805 = vadd.f32 %v803, %v804
      %s806 = vtos %v805
      %v807 = vstv %s806
      %vm808 = vcmask 0
      %809 = vst.msk [vmem:[#allocation15] sm:$0x1] %vm808, %v807
    $region29: #{tpu_custom_call.1} parent=1 // pred_fallthru
      _
    // Predicated region
    $region30: #{tpu_custom_call.1} parent=1 // pred_check
      _
    $region31: #{tpu_custom_call.1} parent=1 // pred_check_branch
      %811 = sbr.rel (0) target = $region33
    $region32: #{tpu_custom_call.1} parent=1 // pred_region
      %s813 = ssub.s32 1024, 1024
      %814 = vsyncadd [#allocation9], %s813
      %s815 = sshll.u32 [#allocation8], 4
      %s816 = int_to_ptr.vmem [resolvable:$true] %s815
      %821 = dma.vmem_to_hbm [thread:$0]  %s816, 1024, %s5, [#allocation9], 128, 128, 8
    $region33: #{tpu_custom_call.1} parent=1 // pred_fallthru
      _
    // Predicated region
    $region34: #{tpu_custom_call.1} parent=1 // pred_check
      _
    $region35: #{tpu_custom_call.1} parent=1 // pred_check_branch
      %823 = sbr.rel (0) target = $region37
    $region36: #{tpu_custom_call.1} parent=1 // pred_region
      %s825 = ssub.s32 128, 128
      %826 = vsyncadd [#allocation11], %s825
      %s828 = sshll.u32 [#allocation10], 4
      %s829 = int_to_ptr.vmem [resolvable:$true] %s828
      %831 = dma.vmem_to_hbm [thread:$0]  %s829, 128, %s6, [#allocation11]
    $region37: #{tpu_custom_call.1} parent=1 // pred_fallthru
      _
    // Predicated region
    $region38: #{tpu_custom_call.1} parent=1 // pred_check
      _
    $region39: #{tpu_custom_call.1} parent=1 // pred_check_branch
      %833 = sbr.rel (0) target = $region41
    $region40: #{tpu_custom_call.1} parent=1 // pred_region
      %s835 = ssub.s32 128, 128
      %836 = vsyncadd [#allocation11], %s835
      %s838 = sshll.u32 [#allocation12], 4
      %s839 = int_to_ptr.vmem [resolvable:$true] %s838
      %841 = dma.vmem_to_hbm [thread:$0]  %s839, 128, %s7, [#allocation11]
    $region41: #{tpu_custom_call.1} parent=1 // pred_fallthru
      _
    // Predicated region
    $region42: #{tpu_custom_call.1} parent=1 // pred_check
      _
    $region43: #{tpu_custom_call.1} parent=1 // pred_check_branch
      %843 = sbr.rel (0) target = $region45
    $region44: #{tpu_custom_call.1} parent=1 // pred_region
      %s845 = ssub.s32 128, 128
      %846 = vsyncadd [#allocation14], %s845
      %s848 = sshll.u32 [#allocation13], 4
      %s849 = int_to_ptr.vmem [resolvable:$true] %s848
      %851 = dma.vmem_to_hbm [thread:$0]  %s849, 128, %s8, [#allocation14]
    $region45: #{tpu_custom_call.1} parent=1 // pred_fallthru
      _
    // Predicated region
    $region46: #{tpu_custom_call.1} parent=1 // pred_check
      _
    $region47: #{tpu_custom_call.1} parent=1 // pred_check_branch
      %853 = sbr.rel (0) target = $region49
    $region48: #{tpu_custom_call.1} parent=1 // pred_region
      %s855 = ssub.s32 16, 16
      %856 = vsyncadd [#allocation14], %s855
      %s858 = sshll.u32 [#allocation15], 4
      %s859 = int_to_ptr.vmem [resolvable:$true] %s858
      %861 = dma.vmem_to_hbm [thread:$0]  %s859, 16, %s9, [#allocation14]
    $region49: #{tpu_custom_call.1} parent=1 // pred_fallthru
      _
    // Predicated region
    $region50: #{tpu_custom_call.1} parent=1 // pred_check
      _
    $region51: #{tpu_custom_call.1} parent=1 // pred_check_branch
      %863 = sbr.rel (0) target = $region53
    $region52: #{tpu_custom_call.1} parent=1 // pred_region
      %864 = dma.done [#allocation9], 1024
    $region53: #{tpu_custom_call.1} parent=1 // pred_fallthru
      _
    // Predicated region
    $region54: #{tpu_custom_call.1} parent=1 // pred_check
      _
    $region55: #{tpu_custom_call.1} parent=1 // pred_check_branch
      %866 = sbr.rel (0) target = $region57
    $region56: #{tpu_custom_call.1} parent=1 // pred_region
      %867 = dma.done [#allocation11], 128
    $region57: #{tpu_custom_call.1} parent=1 // pred_fallthru
      _
    // Predicated region
    $region58: #{tpu_custom_call.1} parent=1 // pred_check
      _
    $region59: #{tpu_custom_call.1} parent=1 // pred_check_branch
      %869 = sbr.rel (0) target = $region61
    $region60: #{tpu_custom_call.1} parent=1 // pred_region
      %870 = dma.done [#allocation11], 128
    $region61: #{tpu_custom_call.1} parent=1 // pred_fallthru
      _
    // Predicated region
    $region62: #{tpu_custom_call.1} parent=1 // pred_check
      _
    $region63: #{tpu_custom_call.1} parent=1 // pred_check_branch
      %872 = sbr.rel (0) target = $region65
    $region64: #{tpu_custom_call.1} parent=1 // pred_region
      %873 = dma.done [#allocation14], 128
    $region65: #{tpu_custom_call.1} parent=1 // pred_fallthru
      _
    // Predicated region
    $region66: #{tpu_custom_call.1} parent=1 // pred_check
      _
    $region67: #{tpu_custom_call.1} parent=1 // pred_check_branch
      %875 = sbr.rel (0) target = $region69
    $region68: #{tpu_custom_call.1} parent=1 // pred_region
      %876 = dma.done [#allocation14], 16
    $region69: #{tpu_custom_call.1} parent=1 // pred_fallthru
      _
    %877 = vsyncpa [#allocation9], 1
    %878 = vsyncpa [#allocation11], 1
    %879 = vsyncpa [#allocation14], 1
  %880 = vsyncmov [#allocation3]
  %s881 = vpop.sfrf %880
  %p882 = scmp.eq.s32.totalorder %s881, 0
  %p883 = pneg %p882
  %885 = shalt.err (%p883)

</llo_original>
